<compile_context>
chip_gen: v6e
topology: v6e:2x2x1
jax: 0.10.0
libtpu: 0.0.40
codegen_flags: <defaults>
</compile_context>

<pallas_src>
import functools

import jax
import jax.numpy as jnp
import numpy as np
from jax.experimental import pallas as pl
from jax.experimental.pallas import tpu as pltpu

_EPS = 1e-5
_LANE = 128


def _round_up(x, m):
    return (x + m - 1) // m * m


def _pick_row_tile(h, w, target_rows=512):
    """Largest row-tile th dividing h with (th*w) % 8 == 0 and th*w <= target."""
    divs = [d for d in range(1, h + 1) if h % d == 0 and (d * w) % 8 == 0]
    fit = [d for d in divs if d * w <= target_rows]
    if fit:
        return max(fit)
    return min(divs) if divs else h


def _pick_rows_tile(r, target_rows=2048):
    divs = [d for d in range(1, r + 1) if r % d == 0 and d % 8 == 0 and d <= target_rows]
    return max(divs) if divs else r


def conv_block_kernel(x_ref, scale_ref, shift_ref, w_ref,
                      y_ref, sum_ref, sq_ref, xpad_ref, *, th, apply_act):
    """One 3x3 conv (pad=1, no bias) layer with the PREVIOUS layer's BN scale/
    shift + ReLU fused into the input path, plus per-tile BN partial stats.

    x_ref     : (1, H, W, Cin)   whole image (raw prev-layer conv out, or input)
    scale_ref : (1, Cin)         prev-layer BN scale  (unused if not apply_act)
    shift_ref : (1, Cin)         prev-layer BN shift
    w_ref     : (9*Cin, Cp)      conv weights, (kh, kw, cin)-major, Cout padded
    y_ref     : (1, th*W, Cp)    raw conv output rows for this spatial tile
    sum_ref   : (1, 1, 1, Cp)    per-tile channel sum of y
    sq_ref    : (1, 1, 1, Cp)    per-tile channel sum of y*y
    xpad_ref  : VMEM (H+2, W+2, Cin) scratch: activated + zero-padded image,
                built once per image at tile index 0 (tile axis is 'arbitrary').
    """
    t = pl.program_id(1)
    _, H, W, Cin = x_ref.shape
    Cp = y_ref.shape[-1]

    @pl.when(t == 0)
    def _build_padded_image():
        x = x_ref[0]                                          # (H, W, Cin)
        if apply_act:                                         # fused prev BN + ReLU
            sc = scale_ref[...].reshape(1, 1, Cin)
            sh = shift_ref[...].reshape(1, 1, Cin)
            x = jnp.maximum(x * sc + sh, 0.0)
        xpad_ref[...] = jnp.zeros_like(xpad_ref)              # zero halo
        xpad_ref[1:H + 1, 1:W + 1, :] = x                     # interior

    # Build the 9 shifted taps from the VMEM scratch and do ONE big MXU matmul.
    r0 = pl.multiple_of(t * th, th)
    taps = []
    for kh in range(3):
        for kw in range(3):
            tap = xpad_ref[pl.ds(r0 + kh, th), kw:kw + W, :]  # (th, W, Cin)
            taps.append(tap.reshape(th * W, Cin))
    patches = jnp.concatenate(taps, axis=-1)                  # (th*W, 9*Cin)
    acc = jnp.dot(patches, w_ref[...],
                  preferred_element_type=jnp.float32)         # (th*W, Cp)

    y_ref[0] = acc.astype(y_ref.dtype)
    sum_ref[...] = jnp.sum(acc, axis=0).reshape(1, 1, 1, Cp)
    sq_ref[...] = jnp.sum(acc * acc, axis=0).reshape(1, 1, 1, Cp)


def conv_layer(x_img, scale_in, shift_in, w2d, *, apply_act, th):
    """x_img: (N, H, W, Cin); w2d: (9*Cin, Cp).
    Returns raw conv output (N, H*W, Cp) and per-tile BN partial stats."""
    N, H, W, Cin = x_img.shape
    Cp = w2d.shape[-1]
    T = H // th

    kernel = functools.partial(conv_block_kernel, th=th, apply_act=apply_act)
    y, s, q = pl.pallas_call(
        kernel,
        grid_spec=pltpu.PrefetchScalarGridSpec(
            num_scalar_prefetch=0,
            grid=(N, T),
            in_specs=[
                pl.BlockSpec((1, H, W, Cin), lambda n, t: (n, 0, 0, 0)),
                pl.BlockSpec((1, Cin), lambda n, t: (0, 0)),
                pl.BlockSpec((1, Cin), lambda n, t: (0, 0)),
                pl.BlockSpec((9 * Cin, Cp), lambda n, t: (0, 0)),
            ],
            out_specs=[
                pl.BlockSpec((1, th * W, Cp), lambda n, t: (n, t, 0)),
                pl.BlockSpec((1, 1, 1, Cp), lambda n, t: (n, t, 0, 0)),
                pl.BlockSpec((1, 1, 1, Cp), lambda n, t: (n, t, 0, 0)),
            ],
            scratch_shapes=[pltpu.VMEM((H + 2, W + 2, Cin), jnp.float32)],
        ),
        out_shape=(
            jax.ShapeDtypeStruct((N, H * W, Cp), jnp.float32),
            jax.ShapeDtypeStruct((N, T, 1, Cp), jnp.float32),
            jax.ShapeDtypeStruct((N, T, 1, Cp), jnp.float32),
        ),
        compiler_params=pltpu.CompilerParams(
            # N parallel (v7x megacore); tile axis arbitrary (scratch reuse).
            dimension_semantics=("parallel", "arbitrary")),
    )(x_img, scale_in, shift_in, w2d)
    return y, s, q


def bn_relu_kernel(y_ref, scale_ref, shift_ref, o_ref):
    o_ref[...] = jnp.maximum(
        y_ref[...] * scale_ref[...] + shift_ref[...], 0.0).astype(o_ref.dtype)


def bn_relu_apply(y, scale, shift):
    """y: (N, HW, Cp) raw conv output -> BN(batch stats already folded into
    scale/shift) + ReLU, lane-dense (Cp multiple of 128)."""
    N, HW, Cp = y.shape
    R = N * HW
    tr = _pick_rows_tile(R)
    out = pl.pallas_call(
        bn_relu_kernel,
        grid=(R // tr,),
        in_specs=[pl.BlockSpec((tr, Cp), lambda i: (i, 0)),
                  pl.BlockSpec((1, Cp), lambda i: (0, 0)),
                  pl.BlockSpec((1, Cp), lambda i: (0, 0))],
        out_specs=pl.BlockSpec((tr, Cp), lambda i: (i, 0)),
        out_shape=jax.ShapeDtypeStruct((R, Cp), jnp.float32),
        compiler_params=pltpu.CompilerParams(dimension_semantics=("parallel",)),
    )(y.reshape(R, Cp), scale, shift)
    return out.reshape(N, HW, Cp)


def _bn_scale_shift(sum_, sq_, count, gamma_p, beta_p):
    """Fold training-mode BatchNorm2d (biased var, eps=1e-5) into scale/shift."""
    mean = jnp.sum(sum_, axis=(0, 1, 2)) / count
    var = jnp.maximum(jnp.sum(sq_, axis=(0, 1, 2)) / count - mean * mean, 0.0)
    inv_std = jax.lax.rsqrt(var + _EPS)
    scale = gamma_p * inv_std
    shift = beta_p - mean * scale
    return scale.reshape(1, -1), shift.reshape(1, -1)


def double_conv(x_nchw, params):
    N, Cin, H, W = x_nchw.shape
    x = jnp.transpose(x_nchw, (0, 2, 3, 1))                       # NCHW -> NHWC

    w1, w2 = params["w1"], params["w2"]                           # HWIO
    Cmid, Cout = w1.shape[-1], w2.shape[-1]
    Cp1 = _round_up(Cmid, _LANE)                                  # lane-dense channels
    Cp2 = _round_up(Cout, _LANE)

    # Weights: (3,3,Cin,Cout) -> (9*Cin, Cp), tap-major (kh, kw, cin); pad output
    # channels (and layer-2 input channels) with zeros so padded lanes stay 0.
    w1p = jnp.pad(w1, ((0, 0), (0, 0), (0, 0), (0, Cp1 - Cmid))).reshape(9 * Cin, Cp1)
    w2p = jnp.pad(w2, ((0, 0), (0, 0), (0, Cp1 - Cmid), (0, Cp2 - Cout))
                  ).reshape(9 * Cp1, Cp2)
    g1 = jnp.pad(params["g1"], (0, Cp1 - Cmid), constant_values=1.0)
    b1 = jnp.pad(params["b1"], (0, Cp1 - Cmid))
    g2 = jnp.pad(params["g2"], (0, Cp2 - Cout), constant_values=1.0)
    b2 = jnp.pad(params["b2"], (0, Cp2 - Cout))

    th = _pick_row_tile(H, W)
    count = float(N * H * W)
    ones1 = jnp.ones((1, Cin), jnp.float32)
    zeros1 = jnp.zeros((1, Cin), jnp.float32)

    # Layer 1: conv only (identity input path) + per-tile BN1 partial stats.
    y1, s1, q1 = conv_layer(x, ones1, zeros1, w1p, apply_act=False, th=th)
    scale1, shift1 = _bn_scale_shift(s1, q1, count, g1, b1)

    # Layer 2: BN1 + ReLU fused into conv2's input path (no extra HBM pass for
    # the mid activation) + per-tile BN2 partial stats.
    y1_img = y1.reshape(N, H, W, Cp1)
    y2, s2, q2 = conv_layer(y1_img, scale1, shift1, w2p, apply_act=True, th=th)
    scale2, shift2 = _bn_scale_shift(s2, q2, count, g2, b2)

    # Final BN2 + ReLU epilogue (lane-dense elementwise kernel).
    out = bn_relu_apply(y2, scale2, shift2)
    out = out[..., :Cout].reshape(N, H, W, Cout)
    return jnp.transpose(out, (0, 3, 1, 2))                       # NHWC -> NCHW


def ref_double_conv(x_nchw, params):
    """Pure-JAX reference for correctness checking."""
    def block(x, w, g, b):
        y = jax.lax.conv_general_dilated(
            x, w, window_strides=(1, 1), padding="SAME",
            dimension_numbers=("NHWC", "HWIO", "NHWC"))
        mean = jnp.mean(y, axis=(0, 1, 2))
        var = jnp.mean((y - mean) ** 2, axis=(0, 1, 2))
        y = (y - mean) / jnp.sqrt(var + _EPS) * g + b
        return jnp.maximum(y, 0.0)
    x = jnp.transpose(x_nchw, (0, 2, 3, 1))
    y = block(x, params["w1"], params["g1"], params["b1"])
    y = block(y, params["w2"], params["g2"], params["b2"])
    return jnp.transpose(y, (0, 3, 1, 2))


if __name__ == "__main__":
    N, in_ch, H, W = 2, 4, 16, 16
    mid_ch = out_ch = 8                     # DoubleConv(in=4, out=8) -> mid=8

    key = jax.random.PRNGKey(0)
    kx, kw1, kw2 = jax.random.split(key, 3)
    x = jax.random.normal(kx, (N, in_ch, H, W), jnp.float32)

    # Deterministic synthetic weights; PyTorch conv layout (Cout,Cin,kh,kw) -> HWIO
    w1_torch = jax.random.normal(kw1, (mid_ch, in_ch, 3, 3), jnp.float32) * 0.1
    w2_torch = jax.random.normal(kw2, (out_ch, mid_ch, 3, 3), jnp.float32) * 0.1
    params = dict(
        w1=jnp.transpose(w1_torch, (2, 3, 1, 0)),
        w2=jnp.transpose(w2_torch, (2, 3, 1, 0)),
        g1=jnp.ones((mid_ch,), jnp.float32), b1=jnp.zeros((mid_ch,), jnp.float32),
        g2=jnp.ones((out_ch,), jnp.float32), b2=jnp.zeros((out_ch,), jnp.float32),
    )

    out = jax.block_until_ready(double_conv(x, params))
    ref = jax.block_until_ready(ref_double_conv(x, params))

    assert out.shape == (N, out_ch, H, W)
    np.testing.assert_allclose(np.asarray(out), np.asarray(ref), atol=2e-3, rtol=2e-3)
    print("KERNEL_OK")
</pallas_src>

<mosaic_0001>
module attributes {stable_mosaic.version = 11 : i64} {
  func.func @conv_block_kernel(%arg0: i32, %arg1: i32, %arg2: memref<1x16x16x4xf32, #tpu.memory_space<vmem>>, %arg3: memref<1x4xf32, #tpu.memory_space<vmem>>, %arg4: memref<1x4xf32, #tpu.memory_space<vmem>>, %arg5: memref<36x128xf32, #tpu.memory_space<vmem>>, %arg6: memref<1x256x128xf32, #tpu.memory_space<vmem>>, %arg7: memref<1x1x1x128xf32, #tpu.memory_space<vmem>>, %arg8: memref<1x1x1x128xf32, #tpu.memory_space<vmem>>, %arg9: memref<18x18x4xf32, #tpu.memory_space<vmem>>) attributes {dimension_semantics = [#tpu.dimension_semantics<parallel>, #tpu.dimension_semantics<arbitrary>], iteration_bounds = array<i64: 2, 1>, scalar_prefetch = 0 : i64, scratch_operands = 1 : i64, tpu.core_type = #tpu.core_type<tc>, window_params = [{transform_indices = @transform_0, window_bounds = array<i64: 1, 16, 16, 4>}, {pipeline_mode = #tpu.pipeline_mode<synchronous>, transform_indices = @transform_1, window_bounds = array<i64: 1, 4>}, {pipeline_mode = #tpu.pipeline_mode<synchronous>, transform_indices = @transform_2, window_bounds = array<i64: 1, 4>}, {pipeline_mode = #tpu.pipeline_mode<synchronous>, transform_indices = @transform_3, window_bounds = array<i64: 36, 128>}, {transform_indices = @transform_4, window_bounds = array<i64: 1, 256, 128>}, {transform_indices = @transform_5, window_bounds = array<i64: 1, 1, 1, 128>}, {transform_indices = @transform_6, window_bounds = array<i64: 1, 1, 1, 128>}]} {
    %c0_i32 = arith.constant 0 : i32
    %0 = arith.cmpi eq, %arg1, %c0_i32 : i32
    %1 = arith.extui %0 : i1 to i32
    %c0_i32_0 = arith.constant 0 : i32
    %2 = arith.cmpi ne, %1, %c0_i32_0 : i32
    scf.if %2 {
      %c0_38 = arith.constant 0 : index
      %c0_39 = arith.constant 0 : index
      %c0_40 = arith.constant 0 : index
      %c0_41 = arith.constant 0 : index
      %54 = vector.load %arg2[%c0_38, %c0_39, %c0_40, %c0_41] : memref<1x16x16x4xf32, #tpu.memory_space<vmem>>, vector<1x16x16x4xf32>
      %55 = vector.shape_cast %54 : vector<1x16x16x4xf32> to vector<16x16x4xf32>
      %cst_42 = arith.constant 0.000000e+00 : f32
      %56 = vector.broadcast %cst_42 : f32 to vector<18x18x4xf32>
      %c0_43 = arith.constant 0 : index
      %c0_44 = arith.constant 0 : index
      %c0_45 = arith.constant 0 : index
      %57 = vector.load %arg9[%c0_43, %c0_44, %c0_45] : memref<18x18x4xf32, #tpu.memory_space<vmem>>, vector<18x18x4xf32>
      tpu.vector_store %arg9[%c0_43, %c0_44, %c0_45], %56 {strides = array<i32>} : memref<18x18x4xf32, #tpu.memory_space<vmem>>, vector<18x18x4xf32>,
      %c1_46 = arith.constant 1 : index
      %c1_47 = arith.constant 1 : index
      %c0_48 = arith.constant 0 : index
      %58 = vector.load %arg9[%c1_46, %c1_47, %c0_48] : memref<18x18x4xf32, #tpu.memory_space<vmem>>, vector<16x16x4xf32>
      tpu.vector_store %arg9[%c1_46, %c1_47, %c0_48], %55 {strides = array<i32>} : memref<18x18x4xf32, #tpu.memory_space<vmem>>, vector<16x16x4xf32>,
    } else {
    }
    %c16_i32 = arith.constant 16 : i32
    %3 = arith.muli %arg1, %c16_i32 : i32
    %4 = tpu.assume_multiple %3, 16 : i32
    %c0_i32_1 = arith.constant 0 : i32
    %5 = arith.addi %4, %c0_i32_1 : i32
    %6 = arith.index_cast %5 : i32 to index
    %c0 = arith.constant 0 : index
    %c0_2 = arith.constant 0 : index
    %7 = vector.load %arg9[%6, %c0, %c0_2] : memref<18x18x4xf32, #tpu.memory_space<vmem>>, vector<16x16x4xf32>
    %8 = vector.shape_cast %7 : vector<16x16x4xf32> to vector<256x4xf32>
    %c0_i32_3 = arith.constant 0 : i32
    %9 = arith.addi %4, %c0_i32_3 : i32
    %10 = arith.index_cast %9 : i32 to index
    %c1 = arith.constant 1 : index
    %c0_4 = arith.constant 0 : index
    %11 = vector.load %arg9[%10, %c1, %c0_4] : memref<18x18x4xf32, #tpu.memory_space<vmem>>, vector<16x16x4xf32>
    %12 = vector.shape_cast %11 : vector<16x16x4xf32> to vector<256x4xf32>
    %c0_i32_5 = arith.constant 0 : i32
    %13 = arith.addi %4, %c0_i32_5 : i32
    %14 = arith.index_cast %13 : i32 to index
    %c2 = arith.constant 2 : index
    %c0_6 = arith.constant 0 : index
    %15 = vector.load %arg9[%14, %c2, %c0_6] : memref<18x18x4xf32, #tpu.memory_space<vmem>>, vector<16x16x4xf32>
    %16 = vector.shape_cast %15 : vector<16x16x4xf32> to vector<256x4xf32>
    %c1_i32 = arith.constant 1 : i32
    %17 = arith.addi %4, %c1_i32 : i32
    %18 = arith.index_cast %17 : i32 to index
    %c0_7 = arith.constant 0 : index
    %c0_8 = arith.constant 0 : index
    %19 = vector.load %arg9[%18, %c0_7, %c0_8] : memref<18x18x4xf32, #tpu.memory_space<vmem>>, vector<16x16x4xf32>
    %20 = vector.shape_cast %19 : vector<16x16x4xf32> to vector<256x4xf32>
    %c1_i32_9 = arith.constant 1 : i32
    %21 = arith.addi %4, %c1_i32_9 : i32
    %22 = arith.index_cast %21 : i32 to index
    %c1_10 = arith.constant 1 : index
    %c0_11 = arith.constant 0 : index
    %23 = vector.load %arg9[%22, %c1_10, %c0_11] : memref<18x18x4xf32, #tpu.memory_space<vmem>>, vector<16x16x4xf32>
    %24 = vector.shape_cast %23 : vector<16x16x4xf32> to vector<256x4xf32>
    %c1_i32_12 = arith.constant 1 : i32
    %25 = arith.addi %4, %c1_i32_12 : i32
    %26 = arith.index_cast %25 : i32 to index
    %c2_13 = arith.constant 2 : index
    %c0_14 = arith.constant 0 : index
    %27 = vector.load %arg9[%26, %c2_13, %c0_14] : memref<18x18x4xf32, #tpu.memory_space<vmem>>, vector<16x16x4xf32>
    %28 = vector.shape_cast %27 : vector<16x16x4xf32> to vector<256x4xf32>
    %c2_i32 = arith.constant 2 : i32
    %29 = arith.addi %4, %c2_i32 : i32
    %30 = arith.index_cast %29 : i32 to index
    %c0_15 = arith.constant 0 : index
    %c0_16 = arith.constant 0 : index
    %31 = vector.load %arg9[%30, %c0_15, %c0_16] : memref<18x18x4xf32, #tpu.memory_space<vmem>>, vector<16x16x4xf32>
    %32 = vector.shape_cast %31 : vector<16x16x4xf32> to vector<256x4xf32>
    %c2_i32_17 = arith.constant 2 : i32
    %33 = arith.addi %4, %c2_i32_17 : i32
    %34 = arith.index_cast %33 : i32 to index
    %c1_18 = arith.constant 1 : index
    %c0_19 = arith.constant 0 : index
    %35 = vector.load %arg9[%34, %c1_18, %c0_19] : memref<18x18x4xf32, #tpu.memory_space<vmem>>, vector<16x16x4xf32>
    %36 = vector.shape_cast %35 : vector<16x16x4xf32> to vector<256x4xf32>
    %c2_i32_20 = arith.constant 2 : i32
    %37 = arith.addi %4, %c2_i32_20 : i32
    %38 = arith.index_cast %37 : i32 to index
    %c2_21 = arith.constant 2 : index
    %c0_22 = arith.constant 0 : index
    %39 = vector.load %arg9[%38, %c2_21, %c0_22] : memref<18x18x4xf32, #tpu.memory_space<vmem>>, vector<16x16x4xf32>
    %40 = vector.shape_cast %39 : vector<16x16x4xf32> to vector<256x4xf32>
    %41 = tpu.concatenate %8, %12, %16, %20, %24, %28, %32, %36, %40 in 1 : vector<256x4xf32>, vector<256x4xf32>, vector<256x4xf32>, vector<256x4xf32>, vector<256x4xf32>, vector<256x4xf32>, vector<256x4xf32>, vector<256x4xf32>, vector<256x4xf32> -> vector<256x36xf32>
    %c0_23 = arith.constant 0 : index
    %c0_24 = arith.constant 0 : index
    %42 = vector.load %arg5[%c0_23, %c0_24] : memref<36x128xf32, #tpu.memory_space<vmem>>, vector<36x128xf32>
    %cst = arith.constant dense<0.000000e+00> : vector<256x128xf32>
    %43 = tpu.matmul %41, %42, %cst {dimension_numbers = #tpu.dot_dimension_numbers<[1], [0], [0], [1], [0, 0, 1, 1], [], []>} : vector<256x36xf32>, vector<36x128xf32>, vector<256x128xf32> -> vector<256x128xf32>
    %c0_25 = arith.constant 0 : index
    %c0_26 = arith.constant 0 : index
    %c0_27 = arith.constant 0 : index
    %44 = vector.load %arg6[%c0_25, %c0_26, %c0_27] : memref<1x256x128xf32, #tpu.memory_space<vmem>>, vector<1x256x128xf32>
    %45 = vector.shape_cast %44 : vector<1x256x128xf32> to vector<256x128xf32>
    %46 = vector.shape_cast %43 : vector<256x128xf32> to vector<1x256x128xf32>
    tpu.vector_store %arg6[%c0_25, %c0_26, %c0_27], %46 {strides = array<i32>} : memref<1x256x128xf32, #tpu.memory_space<vmem>>, vector<1x256x128xf32>,
    %cst_28 = arith.constant dense<0.000000e+00> : vector<128xf32>
    %47 = vector.multi_reduction <add>, %43, %cst_28 [0] : vector<256x128xf32> to vector<128xf32>
    %48 = vector.shape_cast %47 : vector<128xf32> to vector<1x1x1x128xf32>
    %c0_29 = arith.constant 0 : index
    %c0_30 = arith.constant 0 : index
    %c0_31 = arith.constant 0 : index
    %c0_32 = arith.constant 0 : index
    %49 = vector.load %arg7[%c0_29, %c0_30, %c0_31, %c0_32] : memref<1x1x1x128xf32, #tpu.memory_space<vmem>>, vector<1x1x1x128xf32>
    tpu.vector_store %arg7[%c0_29, %c0_30, %c0_31, %c0_32], %48 {strides = array<i32>} : memref<1x1x1x128xf32, #tpu.memory_space<vmem>>, vector<1x1x1x128xf32>,
    %50 = arith.mulf %43, %43 : vector<256x128xf32>
    %cst_33 = arith.constant dense<0.000000e+00> : vector<128xf32>
    %51 = vector.multi_reduction <add>, %50, %cst_33 [0] : vector<256x128xf32> to vector<128xf32>
    %52 = vector.shape_cast %51 : vector<128xf32> to vector<1x1x1x128xf32>
    %c0_34 = arith.constant 0 : index
    %c0_35 = arith.constant 0 : index
    %c0_36 = arith.constant 0 : index
    %c0_37 = arith.constant 0 : index
    %53 = vector.load %arg8[%c0_34, %c0_35, %c0_36, %c0_37] : memref<1x1x1x128xf32, #tpu.memory_space<vmem>>, vector<1x1x1x128xf32>
    tpu.vector_store %arg8[%c0_34, %c0_35, %c0_36, %c0_37], %52 {strides = array<i32>} : memref<1x1x1x128xf32, #tpu.memory_space<vmem>>, vector<1x1x1x128xf32>,
    return
  }
  func.func @transform_0(%arg0: i32, %arg1: i32) -> (i32, i32, i32, i32) {
    %c0_i32 = arith.constant 0 : i32
    %c0_i32_0 = arith.constant 0 : i32
    %c0_i32_1 = arith.constant 0 : i32
    %c0_i32_2 = arith.constant 0 : i32
    return %arg0, %c0_i32, %c0_i32_0, %c0_i32_1 : i32, i32, i32, i32
  }
  func.func @transform_1(%arg0: i32, %arg1: i32) -> (i32, i32) {
    %c0_i32 = arith.constant 0 : i32
    %c0_i32_0 = arith.constant 0 : i32
    %c0_i32_1 = arith.constant 0 : i32
    return %c0_i32, %c0_i32_0 : i32, i32
  }
  func.func @transform_2(%arg0: i32, %arg1: i32) -> (i32, i32) {
    %c0_i32 = arith.constant 0 : i32
    %c0_i32_0 = arith.constant 0 : i32
    %c0_i32_1 = arith.constant 0 : i32
    return %c0_i32, %c0_i32_0 : i32, i32
  }
  func.func @transform_3(%arg0: i32, %arg1: i32) -> (i32, i32) {
    %c0_i32 = arith.constant 0 : i32
    %c0_i32_0 = arith.constant 0 : i32
    %c0_i32_1 = arith.constant 0 : i32
    return %c0_i32, %c0_i32_0 : i32, i32
  }
  func.func @transform_4(%arg0: i32, %arg1: i32) -> (i32, i32, i32) {
    %c0_i32 = arith.constant 0 : i32
    %c0_i32_0 = arith.constant 0 : i32
    return %arg0, %arg1, %c0_i32 : i32, i32, i32
  }
  func.func @transform_5(%arg0: i32, %arg1: i32) -> (i32, i32, i32, i32) {
    %c0_i32 = arith.constant 0 : i32
    %c0_i32_0 = arith.constant 0 : i32
    %c0_i32_1 = arith.constant 0 : i32
    return %arg0, %arg1, %c0_i32, %c0_i32_0 : i32, i32, i32, i32
  }
  func.func @transform_6(%arg0: i32, %arg1: i32) -> (i32, i32, i32, i32) {
    %c0_i32 = arith.constant 0 : i32
    %c0_i32_0 = arith.constant 0 : i32
    %c0_i32_1 = arith.constant 0 : i32
    return %arg0, %arg1, %c0_i32, %c0_i32_0 : i32, i32, i32, i32
  }
}

</mosaic_0001>

<llo_original>
// kernel: tpu_custom_call.1
$region0: #{tpu_custom_call.1}
  #allocation0 [shape = 'u32[]', space=smem, size = 0x4, offset = 0x4, fixed_abs, tag = 'smem constant byte address 0x4 - core index']
  #allocation1 [shape = 'u32[144,128]{1,0:T(1,128)}', space=vmem, size = 0x12000, scoped, tag = 'internal scratch']
  #allocation2 [shape = 'f32[18,18,4]{2,1,0:T(8,128)}', space=vmem, size = 0x36000, scoped, tag = 'scratch operand']
  %s0 = inlined_call_operand.vmem [shape: f32[2,16,16,4], index: 0, kind: input, shape index: {}]
  %s1 = inlined_call_operand.vmem [shape: f32[1,4], index: 1, kind: input, shape index: {}]
  %s2 = inlined_call_operand.vmem [shape: f32[1,4], index: 2, kind: input, shape index: {}]
  %s3 = inlined_call_operand.vmem [shape: f32[36,128], index: 3, kind: input, shape index: {}]
  %s4 = inlined_call_operand.hbm [shape: f32[2,256,128], index: 4, kind: output, shape index: {0}]
  %s5 = inlined_call_operand.hbm [shape: f32[2,1,1,128], index: 5, kind: output, shape index: {1}]
  %s6 = inlined_call_operand.hbm [shape: f32[2,1,1,128], index: 6, kind: output, shape index: {2}]
  %7 = xla_tuple %s4, %s5, %s6
  %s8 = sld [smem:[#allocation0]]
  $region69: #{tpu_custom_call.1} parent=0
    _
  %s10 = ssub.s32 1, %s8
  %s11 = scalar_select 0, %s10, %s8
  $region1: #{tpu_custom_call.1} parent=0
    #allocation3 [shape = 'u8[262144]{0}', space=vmem, size = 0x40000, scoped, tag = 'output window, operand 0']
    #allocation4 [shape = 's32[2]{0}', space=sflag, size = 0x8, scoped, tag = 'scoped memory for tpu_custom_call.1']
    #allocation5 [shape = 'u8[1024]{0}', space=vmem, size = 0x400, scoped, tag = 'output window, operand 1']
    #allocation6 [shape = 's32[2]{0}', space=sflag, size = 0x8, scoped, tag = 'scoped memory for tpu_custom_call.1']
    #allocation7 [shape = 'u8[1024]{0}', space=vmem, size = 0x400, scoped, tag = 'output window, operand 2']
    %12 = vsyncpa [#allocation4], 0
    %s13 = scalar_lea.sflag [#allocation4], 1
    %14 = vsyncpa %s13, 0
    %15 = vsyncpa [#allocation6], 0
    %s16 = scalar_lea.sflag [#allocation6], 1
    %17 = vsyncpa %s16, 0
    loop: start=0, step=1, limit=4
    $region2: #{tpu_custom_call.1} parent=1 // loop_pre_header
      _
    $region3: #{tpu_custom_call.1} parent=1 // loop_header
      %s19 = sphi 0, %s23
      %p20 = scmp.ge.s32.totalorder %s19, 4
      %s26 = sphi 0, %s38
      %s27 = sphi 0, %s34
      %s28 = sphi 0, %s26
      %s29 = sphi 0, %s27
      %s30 = sphi 0, %s28
      %s31 = sphi 0, %s29
      %s41 = sphi 0, %s43
      %s44 = sphi 0, %s41
      %s45 = sphi 0, %s44
      %s61 = sphi 0, %s45
      %s65 = sphi 0, %s65
      %s67 = sphi 0, %s65
      %s68 = sphi 0, %s67
      %s82 = sphi 0, %s68
      %s86 = sphi 0, %s86
      %s88 = sphi 0, %s86
      %s89 = sphi 0, %s88
      %s103 = sphi 0, %s89
      %s107 = sphi 0, %s107
      %s109 = sphi 0, %s107
      %s110 = sphi 0, %s109
      %s124 = sphi 0, %s110
      %s132 = sphi 0, %s134
      %s135 = sphi 0, %s132
      %s136 = sphi 0, %s135
      %s152 = sphi 0, %s136
      %s160 = sphi 0, %s162
      %s163 = sphi 0, %s160
      %s164 = sphi 0, %s163
      %s180 = sphi 0, %s164
      %s188 = sphi 0, %s190
      %s191 = sphi 0, %s188
      %s192 = sphi 0, %s191
      %s208 = sphi 0, %s192
    $region4: #{tpu_custom_call.1} parent=1 // loop_header_branch
      %22 = sbr.rel (%p20) target = $region8
    $region5: #{tpu_custom_call.1} parent=1 // loop_body
      %s24 = ssub.s32 %s19, 1
      %s25 = ssub.s32 %s19, 2
      %s32 = sadd.s32 1, %s27
      %p33 = scmp.ge.s32.totalorder %s32, 1
      %s34 = scalar_select %p33, 0, %s32
      %s35 = sadd.s32 1, %s26
      %s36 = scalar_select %p33, %s35, %s26
      %p37 = scmp.ge.s32.totalorder %s36, 2
      %s38 = scalar_select %p37, 0, %s36
      %s39 = ssub.s32 %s26, %s38
      %p40 = scmp.eq.s32.totalorder %s39, 0
      %s42 = sadd.s32 %s41, 1
      %s43 = scalar_select %p40, %s41, %s42
      %p46 = pneg %p40
      %p47 = scmp.eq.s32.totalorder %s19, 1
      %p48 = por %p46, %p47
      %p49 = scmp.ne.s32.totalorder %s41, %s44
      %p50 = scmp.eq.s32.totalorder %s19, 0
      %p51 = por %p49, %p50
      %p52 = scmp.ne.s32.totalorder %s41, %s44
      %p53 = scmp.eq.s32.totalorder %s24, 1
      %p54 = por %p52, %p53
      %p55 = scmp.ne.s32.totalorder %s44, %s45
      %p56 = scmp.eq.s32.totalorder %s24, 0
      %p57 = por %p55, %p56
      %p58 = scmp.ne.s32.totalorder %s44, %s45
      %p59 = scmp.eq.s32.totalorder %s25, 1
      %p60 = por %p58, %p59
      %p62 = scmp.ne.s32.totalorder %s45, %s61
      %p63 = scmp.eq.s32.totalorder %s25, 0
      %p64 = por %p62, %p63
      %s66 = sadd.s32 %s65, 1
      %p69 = scmp.eq.s32.totalorder %s19, 1
      %p70 = scmp.ne.s32.totalorder %s65, %s67
      %p71 = scmp.eq.s32.totalorder %s19, 0
      %p72 = por %p70, %p71
      %p73 = scmp.ne.s32.totalorder %s65, %s67
      %p74 = scmp.eq.s32.totalorder %s24, 1
      %p75 = por %p73, %p74
      %p76 = scmp.ne.s32.totalorder %s67, %s68
      %p77 = scmp.eq.s32.totalorder %s24, 0
      %p78 = por %p76, %p77
      %p79 = scmp.ne.s32.totalorder %s67, %s68
      %p80 = scmp.eq.s32.totalorder %s25, 1
      %p81 = por %p79, %p80
      %p83 = scmp.ne.s32.totalorder %s68, %s82
      %p84 = scmp.eq.s32.totalorder %s25, 0
      %p85 = por %p83, %p84
      %s87 = sadd.s32 %s86, 1
      %p90 = scmp.eq.s32.totalorder %s19, 1
      %p91 = scmp.ne.s32.totalorder %s86, %s88
      %p92 = scmp.eq.s32.totalorder %s19, 0
      %p93 = por %p91, %p92
      %p94 = scmp.ne.s32.totalorder %s86, %s88
      %p95 = scmp.eq.s32.totalorder %s24, 1
      %p96 = por %p94, %p95
      %p97 = scmp.ne.s32.totalorder %s88, %s89
      %p98 = scmp.eq.s32.totalorder %s24, 0
      %p99 = por %p97, %p98
      %p100 = scmp.ne.s32.totalorder %s88, %s89
      %p101 = scmp.eq.s32.totalorder %s25, 1
      %p102 = por %p100, %p101
      %p104 = scmp.ne.s32.totalorder %s89, %s103
      %p105 = scmp.eq.s32.totalorder %s25, 0
      %p106 = por %p104, %p105
      %s108 = sadd.s32 %s107, 1
      %p111 = scmp.eq.s32.totalorder %s19, 1
      %p112 = scmp.ne.s32.totalorder %s107, %s109
      %p113 = scmp.eq.s32.totalorder %s19, 0
      %p114 = por %p112, %p113
      %p115 = scmp.ne.s32.totalorder %s107, %s109
      %p116 = scmp.eq.s32.totalorder %s24, 1
      %p117 = por %p115, %p116
      %p118 = scmp.ne.s32.totalorder %s109, %s110
      %p119 = scmp.eq.s32.totalorder %s24, 0
      %p120 = por %p118, %p119
      %p121 = scmp.ne.s32.totalorder %s109, %s110
      %p122 = scmp.eq.s32.totalorder %s25, 1
      %p123 = por %p121, %p122
      %p125 = scmp.ne.s32.totalorder %s110, %s124
      %p126 = scmp.eq.s32.totalorder %s25, 0
      %p127 = por %p125, %p126
      %s128 = ssub.s32 %s26, %s38
      %s129 = ssub.s32 %s27, %s34
      %s130 = sor.u32 %s128, %s129
      %p131 = scmp.eq.s32.totalorder %s130, 0
      %s133 = sadd.s32 %s132, 1
      %s134 = scalar_select %p131, %s132, %s133
      %p137 = pneg %p131
      %p138 = scmp.eq.s32.totalorder %s19, 1
      %p139 = por %p137, %p138
      %p140 = scmp.ne.s32.totalorder %s132, %s135
      %p141 = scmp.eq.s32.totalorder %s19, 0
      %p142 = por %p140, %p141
      %p143 = scmp.ne.s32.totalorder %s132, %s135
      %p144 = scmp.eq.s32.totalorder %s24, 1
      %p145 = por %p143, %p144
      %p146 = scmp.ne.s32.totalorder %s135, %s136
      %p147 = scmp.eq.s32.totalorder %s24, 0
      %p148 = por %p146, %p147
      %p149 = scmp.ne.s32.totalorder %s135, %s136
      %p150 = scmp.eq.s32.totalorder %s25, 1
      %p151 = por %p149, %p150
      %p153 = scmp.ne.s32.totalorder %s136, %s152
      %p154 = scmp.eq.s32.totalorder %s25, 0
      %p155 = por %p153, %p154
      %s156 = ssub.s32 %s26, %s38
      %s157 = ssub.s32 %s27, %s34
      %s158 = sor.u32 %s156, %s157
      %p159 = scmp.eq.s32.totalorder %s158, 0
      %s161 = sadd.s32 %s160, 1
      %s162 = scalar_select %p159, %s160, %s161
      %p165 = pneg %p159
      %p166 = scmp.eq.s32.totalorder %s19, 1
      %p167 = por %p165, %p166
      %p168 = scmp.ne.s32.totalorder %s160, %s163
      %p169 = scmp.eq.s32.totalorder %s19, 0
      %p170 = por %p168, %p169
      %p171 = scmp.ne.s32.totalorder %s160, %s163
      %p172 = scmp.eq.s32.totalorder %s24, 1
      %p173 = por %p171, %p172
      %p174 = scmp.ne.s32.totalorder %s163, %s164
      %p175 = scmp.eq.s32.totalorder %s24, 0
      %p176 = por %p174, %p175
      %p177 = scmp.ne.s32.totalorder %s163, %s164
      %p178 = scmp.eq.s32.totalorder %s25, 1
      %p179 = por %p177, %p178
      %p181 = scmp.ne.s32.totalorder %s164, %s180
      %p182 = scmp.eq.s32.totalorder %s25, 0
      %p183 = por %p181, %p182
      %s184 = ssub.s32 %s26, %s38
      %s185 = ssub.s32 %s27, %s34
      %s186 = sor.u32 %s184, %s185
      %p187 = scmp.eq.s32.totalorder %s186, 0
      %s189 = sadd.s32 %s188, 1
      %s190 = scalar_select %p187, %s188, %s189
      %p193 = pneg %p187
      %p194 = scmp.eq.s32.totalorder %s19, 1
      %p195 = por %p193, %p194
      %p196 = scmp.ne.s32.totalorder %s188, %s191
      %p197 = scmp.eq.s32.totalorder %s19, 0
      %p198 = por %p196, %p197
      %p199 = scmp.ne.s32.totalorder %s188, %s191
      %p200 = scmp.eq.s32.totalorder %s24, 1
      %p201 = por %p199, %p200
      %p202 = scmp.ne.s32.totalorder %s191, %s192
      %p203 = scmp.eq.s32.totalorder %s24, 0
      %p204 = por %p202, %p203
      %p205 = scmp.ne.s32.totalorder %s191, %s192
      %p206 = scmp.eq.s32.totalorder %s25, 1
      %p207 = por %p205, %p206
      %p209 = scmp.ne.s32.totalorder %s192, %s208
      %p210 = scmp.eq.s32.totalorder %s25, 0
      %p211 = por %p209, %p210
      %p212 = scmp.le.s32.totalorder 1, %s19
      %p213 = scmp.lt.s32.totalorder %s19, 3
      %p214 = pnand %p212, %p213
      %p215 = pneg %p214
      // Predicated region
      $region9: #{tpu_custom_call.1} parent=5 // pred_check
        _
      $region10: #{tpu_custom_call.1} parent=5 // pred_check_branch
        %217 = sbr.rel (%p214) target = $region12
      $region11: #{tpu_custom_call.1} parent=5 // pred_region
        %s218 = ssub.s32 %s19, 1
        // Predicated region
        $region13: #{tpu_custom_call.1} parent=11 // pred_check
          %p219 = pneg %p78
        $region14: #{tpu_custom_call.1} parent=11 // pred_check_branch
          %221 = sbr.rel (%p219) target = $region16
        $region15: #{tpu_custom_call.1} parent=11 // pred_region
          _
        $region16: #{tpu_custom_call.1} parent=11 // pred_fallthru
          _
        // Predicated region
        $region17: #{tpu_custom_call.1} parent=11 // pred_check
          %p222 = pneg %p99
        $region18: #{tpu_custom_call.1} parent=11 // pred_check_branch
          %224 = sbr.rel (%p222) target = $region20
        $region19: #{tpu_custom_call.1} parent=11 // pred_region
          _
        $region20: #{tpu_custom_call.1} parent=11 // pred_fallthru
          _
        // Predicated region
        $region21: #{tpu_custom_call.1} parent=11 // pred_check
          %p225 = pneg %p120
        $region22: #{tpu_custom_call.1} parent=11 // pred_check_branch
          %227 = sbr.rel (%p225) target = $region24
        $region23: #{tpu_custom_call.1} parent=11 // pred_region
          _
        $region24: #{tpu_custom_call.1} parent=11 // pred_fallthru
          _
      $region12: #{tpu_custom_call.1} parent=5 // pred_fallthru
        _
      %p228 = scmp.lt.s32.totalorder %s19, 2
      // Predicated region
      $region25: #{tpu_custom_call.1} parent=5 // pred_check
        %p229 = pneg %p228
      $region26: #{tpu_custom_call.1} parent=5 // pred_check_branch
        %231 = sbr.rel (%p229) target = $region28
      $region27: #{tpu_custom_call.1} parent=5 // pred_region
        // Predicated region
        $region29: #{tpu_custom_call.1} parent=27 // pred_check
          %p232 = pneg %p51
        $region30: #{tpu_custom_call.1} parent=27 // pred_check_branch
          %234 = sbr.rel (%p232) target = $region32
        $region31: #{tpu_custom_call.1} parent=27 // pred_region
          %p235 = scmp.lt.s32.totalorder %s26, 1
          %s236 = scalar_select %p235, %s26, 1
          %s237 = smul.addr %s236, 32
          %s238 = smul.addr %s237, 8
          %s239 = scalar_lea.vmem %s0, %s238
        $region32: #{tpu_custom_call.1} parent=27 // pred_fallthru
          _
      $region28: #{tpu_custom_call.1} parent=5 // pred_fallthru
        _
      %p240 = scmp.le.s32.totalorder 1, %s19
      %p241 = scmp.lt.s32.totalorder %s19, 3
      %p242 = pnand %p240, %p241
      %p243 = pneg %p242
      // Predicated region
      $region33: #{tpu_custom_call.1} parent=5 // pred_check
        _
      $region34: #{tpu_custom_call.1} parent=5 // pred_check_branch
        %245 = sbr.rel (%p242) target = $region36
      $region35: #{tpu_custom_call.1} parent=5 // pred_region
        %s246 = ssub.s32 %s19, 1
        %p247 = scmp.lt.s32.totalorder %s28, 1
        %s248 = scalar_select %p247, %s28, 1
        %s249 = smul.addr %s248, 32
        %s250 = smul.addr %s249, 8
        %s251 = scalar_lea.vmem %s0, %s250
        %p252 = pneg %p57
        %p253 = pneg %p54
        %p254 = pneg %p78
        %p255 = pneg %p75
        %p256 = pneg %p99
        %p257 = pneg %p96
        %p258 = pneg %p120
        %p259 = pneg %p117
        %p260 = pneg %p148
        %p261 = pneg %p145
        %s262 = sand.u32 %s135, 1
        %s263 = scalar_lea.sflag [#allocation4], %s262
        %s264 = sand.u32 %s135, 1
        %s265 = smul.addr %s264, 256
        %s266 = scalar_lea.vmem [#allocation3], %s265
        %p267 = pneg %p176
        %p268 = pneg %p173
        %s269 = sand.u32 %s24, 1
        %s270 = scalar_lea.sflag [#allocation6], %s269
        %s271 = sand.u32 %s163, 1
        %s272 = scalar_lea.vmem [#allocation5], %s271
        %p273 = pneg %p204
        %p274 = pneg %p201
        %s275 = sand.u32 %s24, 1
        %s276 = scalar_lea.sflag [#allocation6], %s275
        %s277 = sand.u32 %s191, 1
        %s278 = scalar_lea.vmem [#allocation7], %s277
        %p279 = scmp.lt.s32.totalorder %s28, 1
        %s280 = scalar_select %p279, %s28, 1
        %s281 = smul.addr %s280, 32
        %s282 = smul.addr %s281, 8
        %s283 = scalar_lea.vmem %s0, %s282
        %s284 = smul.u32 32, %s29
        %p285 = scmp.eq.s32.totalorder %s29, 0
        // Predicated region
        $region37: #{tpu_custom_call.1} parent=35 // pred_check
          %p286 = pneg %p285
        $region38: #{tpu_custom_call.1} parent=35 // pred_check_branch
          %288 = sbr.rel (%p286) target = $region40
        $region39: #{tpu_custom_call.1} parent=35 // pred_region
          %v289 = vld [vmem:[%s283] sm:$0xff]
          %v290 = vld [vmem:[%s283 + $0x8] sm:$0xff]
          %v291 = vld [vmem:[%s283 + $0x10] sm:$0xff]
          %v292 = vld [vmem:[%s283 + $0x18] sm:$0xff]
          %v293 = vld [vmem:[%s283 + $0x20] sm:$0xff]
          %v294 = vld [vmem:[%s283 + $0x28] sm:$0xff]
          %v295 = vld [vmem:[%s283 + $0x30] sm:$0xff]
          %v296 = vld [vmem:[%s283 + $0x38] sm:$0xff]
          %v297 = vld [vmem:[%s283 + $0x40] sm:$0xff]
          %v298 = vld [vmem:[%s283 + $0x48] sm:$0xff]
          %v299 = vld [vmem:[%s283 + $0x50] sm:$0xff]
          %v300 = vld [vmem:[%s283 + $0x58] sm:$0xff]
          %v301 = vld [vmem:[%s283 + $0x60] sm:$0xff]
          %v302 = vld [vmem:[%s283 + $0x68] sm:$0xff]
          %v303 = vld [vmem:[%s283 + $0x70] sm:$0xff]
          %v304 = vld [vmem:[%s283 + $0x78] sm:$0xff]
          %v305 = vld [vmem:[%s283 + $0x80] sm:$0xff]
          %v306 = vld [vmem:[%s283 + $0x88] sm:$0xff]
          %v307 = vld [vmem:[%s283 + $0x90] sm:$0xff]
          %v308 = vld [vmem:[%s283 + $0x98] sm:$0xff]
          %v309 = vld [vmem:[%s283 + $0xa0] sm:$0xff]
          %v310 = vld [vmem:[%s283 + $0xa8] sm:$0xff]
          %v311 = vld [vmem:[%s283 + $0xb0] sm:$0xff]
          %v312 = vld [vmem:[%s283 + $0xb8] sm:$0xff]
          %v313 = vld [vmem:[%s283 + $0xc0] sm:$0xff]
          %v314 = vld [vmem:[%s283 + $0xc8] sm:$0xff]
          %v315 = vld [vmem:[%s283 + $0xd0] sm:$0xff]
          %v316 = vld [vmem:[%s283 + $0xd8] sm:$0xff]
          %v317 = vld [vmem:[%s283 + $0xe0] sm:$0xff]
          %v318 = vld [vmem:[%s283 + $0xe8] sm:$0xff]
          %v319 = vld [vmem:[%s283 + $0xf0] sm:$0xff]
          %v320 = vld [vmem:[%s283 + $0xf8] sm:$0xff]
          %vm321 = vcmask 31744
          %322 = vst.msk [vmem:[#allocation2] sm:$0xff] %vm321, 0.0
          %323 = vst.msk [vmem:[#allocation2 + $0x8] sm:$0xff] %vm321, 0.0
          %vm324 = vcmask 25600
          %325 = vst.msk [vmem:[#allocation2 + $0x10] sm:$0x3] %vm324, 0.0
          %326 = vst.msk [vmem:[#allocation2 + $0x18] sm:$0xff] %vm321, 0.0
          %327 = vst.msk [vmem:[#allocation2 + $0x20] sm:$0xff] %vm321, 0.0
          %328 = vst.msk [vmem:[#allocation2 + $0x28] sm:$0x3] %vm324, 0.0
          %329 = vst.msk [vmem:[#allocation2 + $0x30] sm:$0xff] %vm321, 0.0
          %330 = vst.msk [vmem:[#allocation2 + $0x38] sm:$0xff] %vm321, 0.0
          %331 = vst.msk [vmem:[#allocation2 + $0x40] sm:$0x3] %vm324, 0.0
          %332 = vst.msk [vmem:[#allocation2 + $0x48] sm:$0xff] %vm321, 0.0
          %333 = vst.msk [vmem:[#allocation2 + $0x50] sm:$0xff] %vm321, 0.0
          %334 = vst.msk [vmem:[#allocation2 + $0x58] sm:$0x3] %vm324, 0.0
          %335 = vst.msk [vmem:[#allocation2 + $0x60] sm:$0xff] %vm321, 0.0
          %336 = vst.msk [vmem:[#allocation2 + $0x68] sm:$0xff] %vm321, 0.0
          %337 = vst.msk [vmem:[#allocation2 + $0x70] sm:$0x3] %vm324, 0.0
          %338 = vst.msk [vmem:[#allocation2 + $0x78] sm:$0xff] %vm321, 0.0
          %339 = vst.msk [vmem:[#allocation2 + $0x80] sm:$0xff] %vm321, 0.0
          %340 = vst.msk [vmem:[#allocation2 + $0x88] sm:$0x3] %vm324, 0.0
          %341 = vst.msk [vmem:[#allocation2 + $0x90] sm:$0xff] %vm321, 0.0
          %342 = vst.msk [vmem:[#allocation2 + $0x98] sm:$0xff] %vm321, 0.0
          %343 = vst.msk [vmem:[#allocation2 + $0xa0] sm:$0x3] %vm324, 0.0
          %344 = vst.msk [vmem:[#allocation2 + $0xa8] sm:$0xff] %vm321, 0.0
          %345 = vst.msk [vmem:[#allocation2 + $0xb0] sm:$0xff] %vm321, 0.0
          %346 = vst.msk [vmem:[#allocation2 + $0xb8] sm:$0x3] %vm324, 0.0
          %347 = vst.msk [vmem:[#allocation2 + $0xc0] sm:$0xff] %vm321, 0.0
          %348 = vst.msk [vmem:[#allocation2 + $0xc8] sm:$0xff] %vm321, 0.0
          %349 = vst.msk [vmem:[#allocation2 + $0xd0] sm:$0x3] %vm324, 0.0
          %350 = vst.msk [vmem:[#allocation2 + $0xd8] sm:$0xff] %vm321, 0.0
          %351 = vst.msk [vmem:[#allocation2 + $0xe0] sm:$0xff] %vm321, 0.0
          %352 = vst.msk [vmem:[#allocation2 + $0xe8] sm:$0x3] %vm324, 0.0
          %353 = vst.msk [vmem:[#allocation2 + $0xf0] sm:$0xff] %vm321, 0.0
          %354 = vst.msk [vmem:[#allocation2 + $0xf8] sm:$0xff] %vm321, 0.0
          %355 = vst.msk [vmem:[#allocation2 + $0x100] sm:$0x3] %vm324, 0.0
          %356 = vst.msk [vmem:[#allocation2 + $0x108] sm:$0xff] %vm321, 0.0
          %357 = vst.msk [vmem:[#allocation2 + $0x110] sm:$0xff] %vm321, 0.0
          %358 = vst.msk [vmem:[#allocation2 + $0x118] sm:$0x3] %vm324, 0.0
          %359 = vst.msk [vmem:[#allocation2 + $0x120] sm:$0xff] %vm321, 0.0
          %360 = vst.msk [vmem:[#allocation2 + $0x128] sm:$0xff] %vm321, 0.0
          %361 = vst.msk [vmem:[#allocation2 + $0x130] sm:$0x3] %vm324, 0.0
          %362 = vst.msk [vmem:[#allocation2 + $0x138] sm:$0xff] %vm321, 0.0
          %363 = vst.msk [vmem:[#allocation2 + $0x140] sm:$0xff] %vm321, 0.0
          %364 = vst.msk [vmem:[#allocation2 + $0x148] sm:$0x3] %vm324, 0.0
          %365 = vst.msk [vmem:[#allocation2 + $0x150] sm:$0xff] %vm321, 0.0
          %366 = vst.msk [vmem:[#allocation2 + $0x158] sm:$0xff] %vm321, 0.0
          %367 = vst.msk [vmem:[#allocation2 + $0x160] sm:$0x3] %vm324, 0.0
          %368 = vst.msk [vmem:[#allocation2 + $0x168] sm:$0xff] %vm321, 0.0
          %369 = vst.msk [vmem:[#allocation2 + $0x170] sm:$0xff] %vm321, 0.0
          %370 = vst.msk [vmem:[#allocation2 + $0x178] sm:$0x3] %vm324, 0.0
          %371 = vst.msk [vmem:[#allocation2 + $0x180] sm:$0xff] %vm321, 0.0
          %372 = vst.msk [vmem:[#allocation2 + $0x188] sm:$0xff] %vm321, 0.0
          %373 = vst.msk [vmem:[#allocation2 + $0x190] sm:$0x3] %vm324, 0.0
          %374 = vst.msk [vmem:[#allocation2 + $0x198] sm:$0xff] %vm321, 0.0
          %375 = vst.msk [vmem:[#allocation2 + $0x1a0] sm:$0xff] %vm321, 0.0
          %376 = vst.msk [vmem:[#allocation2 + $0x1a8] sm:$0x3] %vm324, 0.0
          %s377 = scalar_lea.vmem [#allocation2], 24
          %378 = vst.msk [vmem:[%s377 + $0x1] sm:$0xff] %vm321, %v289
          %379 = vst.msk [vmem:[%s377 + $0x9] sm:$0xff] %vm321, %v290
          %380 = vst.msk [vmem:[%s377 + $0x19] sm:$0xff] %vm321, %v291
          %381 = vst.msk [vmem:[%s377 + $0x21] sm:$0xff] %vm321, %v292
          %382 = vst.msk [vmem:[%s377 + $0x31] sm:$0xff] %vm321, %v293
          %383 = vst.msk [vmem:[%s377 + $0x39] sm:$0xff] %vm321, %v294
          %384 = vst.msk [vmem:[%s377 + $0x49] sm:$0xff] %vm321, %v295
          %385 = vst.msk [vmem:[%s377 + $0x51] sm:$0xff] %vm321, %v296
          %386 = vst.msk [vmem:[%s377 + $0x61] sm:$0xff] %vm321, %v297
          %387 = vst.msk [vmem:[%s377 + $0x69] sm:$0xff] %vm321, %v298
          %388 = vst.msk [vmem:[%s377 + $0x79] sm:$0xff] %vm321, %v299
          %389 = vst.msk [vmem:[%s377 + $0x81] sm:$0xff] %vm321, %v300
          %390 = vst.msk [vmem:[%s377 + $0x91] sm:$0xff] %vm321, %v301
          %391 = vst.msk [vmem:[%s377 + $0x99] sm:$0xff] %vm321, %v302
          %392 = vst.msk [vmem:[%s377 + $0xa9] sm:$0xff] %vm321, %v303
          %393 = vst.msk [vmem:[%s377 + $0xb1] sm:$0xff] %vm321, %v304
          %394 = vst.msk [vmem:[%s377 + $0xc1] sm:$0xff] %vm321, %v305
          %395 = vst.msk [vmem:[%s377 + $0xc9] sm:$0xff] %vm321, %v306
          %396 = vst.msk [vmem:[%s377 + $0xd9] sm:$0xff] %vm321, %v307
          %397 = vst.msk [vmem:[%s377 + $0xe1] sm:$0xff] %vm321, %v308
          %398 = vst.msk [vmem:[%s377 + $0xf1] sm:$0xff] %vm321, %v309
          %399 = vst.msk [vmem:[%s377 + $0xf9] sm:$0xff] %vm321, %v310
          %400 = vst.msk [vmem:[%s377 + $0x109] sm:$0xff] %vm321, %v311
          %401 = vst.msk [vmem:[%s377 + $0x111] sm:$0xff] %vm321, %v312
          %402 = vst.msk [vmem:[%s377 + $0x121] sm:$0xff] %vm321, %v313
          %403 = vst.msk [vmem:[%s377 + $0x129] sm:$0xff] %vm321, %v314
          %404 = vst.msk [vmem:[%s377 + $0x139] sm:$0xff] %vm321, %v315
          %405 = vst.msk [vmem:[%s377 + $0x141] sm:$0xff] %vm321, %v316
          %406 = vst.msk [vmem:[%s377 + $0x151] sm:$0xff] %vm321, %v317
          %407 = vst.msk [vmem:[%s377 + $0x159] sm:$0xff] %vm321, %v318
          %408 = vst.msk [vmem:[%s377 + $0x169] sm:$0xff] %vm321, %v319
          %409 = vst.msk [vmem:[%s377 + $0x171] sm:$0xff] %vm321, %v320
        $region40: #{tpu_custom_call.1} parent=35 // pred_fallthru
          _
        %s410 = smul.u32 %s29, 16
        %s411 = smul.u32 %s410, 24
        %s412 = scalar_lea.vmem [#allocation2], %s411
        %v413 = vld [vmem:[%s412] sm:$0xff]
        %v414 = vld [vmem:[%s412 + $0x8] sm:$0xff]
        %v415 = vld [vmem:[%s412 + $0x18] sm:$0xff]
        %v416 = vld [vmem:[%s412 + $0x20] sm:$0xff]
        %v417 = vld [vmem:[%s412 + $0x30] sm:$0xff]
        %v418 = vld [vmem:[%s412 + $0x38] sm:$0xff]
        %v419 = vld [vmem:[%s412 + $0x48] sm:$0xff]
        %v420 = vld [vmem:[%s412 + $0x50] sm:$0xff]
        %v421 = vld [vmem:[%s412 + $0x60] sm:$0xff]
        %v422 = vld [vmem:[%s412 + $0x68] sm:$0xff]
        %v423 = vld [vmem:[%s412 + $0x78] sm:$0xff]
        %v424 = vld [vmem:[%s412 + $0x80] sm:$0xff]
        %v425 = vld [vmem:[%s412 + $0x90] sm:$0xff]
        %v426 = vld [vmem:[%s412 + $0x98] sm:$0xff]
        %v427 = vld [vmem:[%s412 + $0xa8] sm:$0xff]
        %v428 = vld [vmem:[%s412 + $0xb0] sm:$0xff]
        %v429 = vld [vmem:[%s412 + $0xc0] sm:$0xff]
        %v430 = vld [vmem:[%s412 + $0xc8] sm:$0xff]
        %v431 = vld [vmem:[%s412 + $0xd8] sm:$0xff]
        %v432 = vld [vmem:[%s412 + $0xe0] sm:$0xff]
        %v433 = vld [vmem:[%s412 + $0xf0] sm:$0xff]
        %v434 = vld [vmem:[%s412 + $0xf8] sm:$0xff]
        %v435 = vld [vmem:[%s412 + $0x108] sm:$0xff]
        %v436 = vld [vmem:[%s412 + $0x110] sm:$0xff]
        %v437 = vld [vmem:[%s412 + $0x120] sm:$0xff]
        %v438 = vld [vmem:[%s412 + $0x128] sm:$0xff]
        %v439 = vld [vmem:[%s412 + $0x138] sm:$0xff]
        %v440 = vld [vmem:[%s412 + $0x140] sm:$0xff]
        %v441 = vld [vmem:[%s412 + $0x150] sm:$0xff]
        %v442 = vld [vmem:[%s412 + $0x158] sm:$0xff]
        %v443 = vld [vmem:[%s412 + $0x168] sm:$0xff]
        %v444 = vld [vmem:[%s412 + $0x170] sm:$0xff]
        %v445 = vld [vmem:[%s412 + $0x1] sm:$0xff]
        %v446 = vld [vmem:[%s412 + $0x9] sm:$0xff]
        %v447 = vld [vmem:[%s412 + $0x19] sm:$0xff]
        %v448 = vld [vmem:[%s412 + $0x21] sm:$0xff]
        %v449 = vld [vmem:[%s412 + $0x31] sm:$0xff]
        %v450 = vld [vmem:[%s412 + $0x39] sm:$0xff]
        %v451 = vld [vmem:[%s412 + $0x49] sm:$0xff]
        %v452 = vld [vmem:[%s412 + $0x51] sm:$0xff]
        %v453 = vld [vmem:[%s412 + $0x61] sm:$0xff]
        %v454 = vld [vmem:[%s412 + $0x69] sm:$0xff]
        %v455 = vld [vmem:[%s412 + $0x79] sm:$0xff]
        %v456 = vld [vmem:[%s412 + $0x81] sm:$0xff]
        %v457 = vld [vmem:[%s412 + $0x91] sm:$0xff]
        %v458 = vld [vmem:[%s412 + $0x99] sm:$0xff]
        %v459 = vld [vmem:[%s412 + $0xa9] sm:$0xff]
        %v460 = vld [vmem:[%s412 + $0xb1] sm:$0xff]
        %v461 = vld [vmem:[%s412 + $0xc1] sm:$0xff]
        %v462 = vld [vmem:[%s412 + $0xc9] sm:$0xff]
        %v463 = vld [vmem:[%s412 + $0xd9] sm:$0xff]
        %v464 = vld [vmem:[%s412 + $0xe1] sm:$0xff]
        %v465 = vld [vmem:[%s412 + $0xf1] sm:$0xff]
        %v466 = vld [vmem:[%s412 + $0xf9] sm:$0xff]
        %v467 = vld [vmem:[%s412 + $0x109] sm:$0xff]
        %v468 = vld [vmem:[%s412 + $0x111] sm:$0xff]
        %v469 = vld [vmem:[%s412 + $0x121] sm:$0xff]
        %v470 = vld [vmem:[%s412 + $0x129] sm:$0xff]
        %v471 = vld [vmem:[%s412 + $0x139] sm:$0xff]
        %v472 = vld [vmem:[%s412 + $0x141] sm:$0xff]
        %v473 = vld [vmem:[%s412 + $0x151] sm:$0xff]
        %v474 = vld [vmem:[%s412 + $0x159] sm:$0xff]
        %v475 = vld [vmem:[%s412 + $0x169] sm:$0xff]
        %v476 = vld [vmem:[%s412 + $0x171] sm:$0xff]
        %v477 = vld [vmem:[%s412 + $0x2] sm:$0xff]
        %v478 = vld [vmem:[%s412 + $0xa] sm:$0xff]
        %v479 = vld [vmem:[%s412 + $0x1a] sm:$0xff]
        %v480 = vld [vmem:[%s412 + $0x22] sm:$0xff]
        %v481 = vld [vmem:[%s412 + $0x32] sm:$0xff]
        %v482 = vld [vmem:[%s412 + $0x3a] sm:$0xff]
        %v483 = vld [vmem:[%s412 + $0x4a] sm:$0xff]
        %v484 = vld [vmem:[%s412 + $0x52] sm:$0xff]
        %v485 = vld [vmem:[%s412 + $0x62] sm:$0xff]
        %v486 = vld [vmem:[%s412 + $0x6a] sm:$0xff]
        %v487 = vld [vmem:[%s412 + $0x7a] sm:$0xff]
        %v488 = vld [vmem:[%s412 + $0x82] sm:$0xff]
        %v489 = vld [vmem:[%s412 + $0x92] sm:$0xff]
        %v490 = vld [vmem:[%s412 + $0x9a] sm:$0xff]
        %v491 = vld [vmem:[%s412 + $0xaa] sm:$0xff]
        %v492 = vld [vmem:[%s412 + $0xb2] sm:$0xff]
        %v493 = vld [vmem:[%s412 + $0xc2] sm:$0xff]
        %v494 = vld [vmem:[%s412 + $0xca] sm:$0xff]
        %v495 = vld [vmem:[%s412 + $0xda] sm:$0xff]
        %v496 = vld [vmem:[%s412 + $0xe2] sm:$0xff]
        %v497 = vld [vmem:[%s412 + $0xf2] sm:$0xff]
        %v498 = vld [vmem:[%s412 + $0xfa] sm:$0xff]
        %v499 = vld [vmem:[%s412 + $0x10a] sm:$0xff]
        %v500 = vld [vmem:[%s412 + $0x112] sm:$0xff]
        %v501 = vld [vmem:[%s412 + $0x122] sm:$0xff]
        %v502 = vld [vmem:[%s412 + $0x12a] sm:$0xff]
        %v503 = vld [vmem:[%s412 + $0x13a] sm:$0xff]
        %v504 = vld [vmem:[%s412 + $0x142] sm:$0xff]
        %v505 = vld [vmem:[%s412 + $0x152] sm:$0xff]
        %v506 = vld [vmem:[%s412 + $0x15a] sm:$0xff]
        %v507 = vld [vmem:[%s412 + $0x16a] sm:$0xff]
        %v508 = vld [vmem:[%s412 + $0x172] sm:$0xff]
        %s509 = sadd.s32 %s410, 1
        %s510 = smul.u32 %s509, 24
        %s511 = scalar_lea.vmem [#allocation2], %s510
        %v512 = vld [vmem:[%s511] sm:$0xff]
        %v513 = vld [vmem:[%s511 + $0x8] sm:$0xff]
        %v514 = vld [vmem:[%s511 + $0x18] sm:$0xff]
        %v515 = vld [vmem:[%s511 + $0x20] sm:$0xff]
        %v516 = vld [vmem:[%s511 + $0x30] sm:$0xff]
        %v517 = vld [vmem:[%s511 + $0x38] sm:$0xff]
        %v518 = vld [vmem:[%s511 + $0x48] sm:$0xff]
        %v519 = vld [vmem:[%s511 + $0x50] sm:$0xff]
        %v520 = vld [vmem:[%s511 + $0x60] sm:$0xff]
        %v521 = vld [vmem:[%s511 + $0x68] sm:$0xff]
        %v522 = vld [vmem:[%s511 + $0x78] sm:$0xff]
        %v523 = vld [vmem:[%s511 + $0x80] sm:$0xff]
        %v524 = vld [vmem:[%s511 + $0x90] sm:$0xff]
        %v525 = vld [vmem:[%s511 + $0x98] sm:$0xff]
        %v526 = vld [vmem:[%s511 + $0xa8] sm:$0xff]
        %v527 = vld [vmem:[%s511 + $0xb0] sm:$0xff]
        %v528 = vld [vmem:[%s511 + $0xc0] sm:$0xff]
        %v529 = vld [vmem:[%s511 + $0xc8] sm:$0xff]
        %v530 = vld [vmem:[%s511 + $0xd8] sm:$0xff]
        %v531 = vld [vmem:[%s511 + $0xe0] sm:$0xff]
        %v532 = vld [vmem:[%s511 + $0xf0] sm:$0xff]
        %v533 = vld [vmem:[%s511 + $0xf8] sm:$0xff]
        %v534 = vld [vmem:[%s511 + $0x108] sm:$0xff]
        %v535 = vld [vmem:[%s511 + $0x110] sm:$0xff]
        %v536 = vld [vmem:[%s511 + $0x120] sm:$0xff]
        %v537 = vld [vmem:[%s511 + $0x128] sm:$0xff]
        %v538 = vld [vmem:[%s511 + $0x138] sm:$0xff]
        %v539 = vld [vmem:[%s511 + $0x140] sm:$0xff]
        %v540 = vld [vmem:[%s511 + $0x150] sm:$0xff]
        %v541 = vld [vmem:[%s511 + $0x158] sm:$0xff]
        %v542 = vld [vmem:[%s511 + $0x168] sm:$0xff]
        %v543 = vld [vmem:[%s511 + $0x170] sm:$0xff]
        %v544 = vld [vmem:[%s511 + $0x1] sm:$0xff]
        %v545 = vld [vmem:[%s511 + $0x9] sm:$0xff]
        %v546 = vld [vmem:[%s511 + $0x19] sm:$0xff]
        %v547 = vld [vmem:[%s511 + $0x21] sm:$0xff]
        %v548 = vld [vmem:[%s511 + $0x31] sm:$0xff]
        %v549 = vld [vmem:[%s511 + $0x39] sm:$0xff]
        %v550 = vld [vmem:[%s511 + $0x49] sm:$0xff]
        %v551 = vld [vmem:[%s511 + $0x51] sm:$0xff]
        %v552 = vld [vmem:[%s511 + $0x61] sm:$0xff]
        %v553 = vld [vmem:[%s511 + $0x69] sm:$0xff]
        %v554 = vld [vmem:[%s511 + $0x79] sm:$0xff]
        %v555 = vld [vmem:[%s511 + $0x81] sm:$0xff]
        %v556 = vld [vmem:[%s511 + $0x91] sm:$0xff]
        %v557 = vld [vmem:[%s511 + $0x99] sm:$0xff]
        %v558 = vld [vmem:[%s511 + $0xa9] sm:$0xff]
        %v559 = vld [vmem:[%s511 + $0xb1] sm:$0xff]
        %v560 = vld [vmem:[%s511 + $0xc1] sm:$0xff]
        %v561 = vld [vmem:[%s511 + $0xc9] sm:$0xff]
        %v562 = vld [vmem:[%s511 + $0xd9] sm:$0xff]
        %v563 = vld [vmem:[%s511 + $0xe1] sm:$0xff]
        %v564 = vld [vmem:[%s511 + $0xf1] sm:$0xff]
        %v565 = vld [vmem:[%s511 + $0xf9] sm:$0xff]
        %v566 = vld [vmem:[%s511 + $0x109] sm:$0xff]
        %v567 = vld [vmem:[%s511 + $0x111] sm:$0xff]
        %v568 = vld [vmem:[%s511 + $0x121] sm:$0xff]
        %v569 = vld [vmem:[%s511 + $0x129] sm:$0xff]
        %v570 = vld [vmem:[%s511 + $0x139] sm:$0xff]
        %v571 = vld [vmem:[%s511 + $0x141] sm:$0xff]
        %v572 = vld [vmem:[%s511 + $0x151] sm:$0xff]
        %v573 = vld [vmem:[%s511 + $0x159] sm:$0xff]
        %v574 = vld [vmem:[%s511 + $0x169] sm:$0xff]
        %v575 = vld [vmem:[%s511 + $0x171] sm:$0xff]
        %v576 = vld [vmem:[%s511 + $0x2] sm:$0xff]
        %v577 = vld [vmem:[%s511 + $0xa] sm:$0xff]
        %v578 = vld [vmem:[%s511 + $0x1a] sm:$0xff]
        %v579 = vld [vmem:[%s511 + $0x22] sm:$0xff]
        %v580 = vld [vmem:[%s511 + $0x32] sm:$0xff]
        %v581 = vld [vmem:[%s511 + $0x3a] sm:$0xff]
        %v582 = vld [vmem:[%s511 + $0x4a] sm:$0xff]
        %v583 = vld [vmem:[%s511 + $0x52] sm:$0xff]
        %v584 = vld [vmem:[%s511 + $0x62] sm:$0xff]
        %v585 = vld [vmem:[%s511 + $0x6a] sm:$0xff]
        %v586 = vld [vmem:[%s511 + $0x7a] sm:$0xff]
        %v587 = vld [vmem:[%s511 + $0x82] sm:$0xff]
        %v588 = vld [vmem:[%s511 + $0x92] sm:$0xff]
        %v589 = vld [vmem:[%s511 + $0x9a] sm:$0xff]
        %v590 = vld [vmem:[%s511 + $0xaa] sm:$0xff]
        %v591 = vld [vmem:[%s511 + $0xb2] sm:$0xff]
        %v592 = vld [vmem:[%s511 + $0xc2] sm:$0xff]
        %v593 = vld [vmem:[%s511 + $0xca] sm:$0xff]
        %v594 = vld [vmem:[%s511 + $0xda] sm:$0xff]
        %v595 = vld [vmem:[%s511 + $0xe2] sm:$0xff]
        %v596 = vld [vmem:[%s511 + $0xf2] sm:$0xff]
        %v597 = vld [vmem:[%s511 + $0xfa] sm:$0xff]
        %v598 = vld [vmem:[%s511 + $0x10a] sm:$0xff]
        %v599 = vld [vmem:[%s511 + $0x112] sm:$0xff]
        %v600 = vld [vmem:[%s511 + $0x122] sm:$0xff]
        %v601 = vld [vmem:[%s511 + $0x12a] sm:$0xff]
        %v602 = vld [vmem:[%s511 + $0x13a] sm:$0xff]
        %v603 = vld [vmem:[%s511 + $0x142] sm:$0xff]
        %v604 = vld [vmem:[%s511 + $0x152] sm:$0xff]
        %v605 = vld [vmem:[%s511 + $0x15a] sm:$0xff]
        %v606 = vld [vmem:[%s511 + $0x16a] sm:$0xff]
        %v607 = vld [vmem:[%s511 + $0x172] sm:$0xff]
        %s608 = sadd.s32 %s410, 2
        %s609 = smul.u32 %s608, 24
        %s610 = scalar_lea.vmem [#allocation2], %s609
        %v611 = vld [vmem:[%s610] sm:$0xff]
        %v612 = vld [vmem:[%s610 + $0x8] sm:$0xff]
        %v613 = vld [vmem:[%s610 + $0x18] sm:$0xff]
        %v614 = vld [vmem:[%s610 + $0x20] sm:$0xff]
        %v615 = vld [vmem:[%s610 + $0x30] sm:$0xff]
        %v616 = vld [vmem:[%s610 + $0x38] sm:$0xff]
        %v617 = vld [vmem:[%s610 + $0x48] sm:$0xff]
        %v618 = vld [vmem:[%s610 + $0x50] sm:$0xff]
        %v619 = vld [vmem:[%s610 + $0x60] sm:$0xff]
        %v620 = vld [vmem:[%s610 + $0x68] sm:$0xff]
        %v621 = vld [vmem:[%s610 + $0x78] sm:$0xff]
        %v622 = vld [vmem:[%s610 + $0x80] sm:$0xff]
        %v623 = vld [vmem:[%s610 + $0x90] sm:$0xff]
        %v624 = vld [vmem:[%s610 + $0x98] sm:$0xff]
        %v625 = vld [vmem:[%s610 + $0xa8] sm:$0xff]
        %v626 = vld [vmem:[%s610 + $0xb0] sm:$0xff]
        %v627 = vld [vmem:[%s610 + $0xc0] sm:$0xff]
        %v628 = vld [vmem:[%s610 + $0xc8] sm:$0xff]
        %v629 = vld [vmem:[%s610 + $0xd8] sm:$0xff]
        %v630 = vld [vmem:[%s610 + $0xe0] sm:$0xff]
        %v631 = vld [vmem:[%s610 + $0xf0] sm:$0xff]
        %v632 = vld [vmem:[%s610 + $0xf8] sm:$0xff]
        %v633 = vld [vmem:[%s610 + $0x108] sm:$0xff]
        %v634 = vld [vmem:[%s610 + $0x110] sm:$0xff]
        %v635 = vld [vmem:[%s610 + $0x120] sm:$0xff]
        %v636 = vld [vmem:[%s610 + $0x128] sm:$0xff]
        %v637 = vld [vmem:[%s610 + $0x138] sm:$0xff]
        %v638 = vld [vmem:[%s610 + $0x140] sm:$0xff]
        %v639 = vld [vmem:[%s610 + $0x150] sm:$0xff]
        %v640 = vld [vmem:[%s610 + $0x158] sm:$0xff]
        %v641 = vld [vmem:[%s610 + $0x168] sm:$0xff]
        %v642 = vld [vmem:[%s610 + $0x170] sm:$0xff]
        %v643 = vld [vmem:[%s610 + $0x1] sm:$0xff]
        %v644 = vld [vmem:[%s610 + $0x9] sm:$0xff]
        %v645 = vld [vmem:[%s610 + $0x19] sm:$0xff]
        %v646 = vld [vmem:[%s610 + $0x21] sm:$0xff]
        %v647 = vld [vmem:[%s610 + $0x31] sm:$0xff]
        %v648 = vld [vmem:[%s610 + $0x39] sm:$0xff]
        %v649 = vld [vmem:[%s610 + $0x49] sm:$0xff]
        %v650 = vld [vmem:[%s610 + $0x51] sm:$0xff]
        %v651 = vld [vmem:[%s610 + $0x61] sm:$0xff]
        %v652 = vld [vmem:[%s610 + $0x69] sm:$0xff]
        %v653 = vld [vmem:[%s610 + $0x79] sm:$0xff]
        %v654 = vld [vmem:[%s610 + $0x81] sm:$0xff]
        %v655 = vld [vmem:[%s610 + $0x91] sm:$0xff]
        %v656 = vld [vmem:[%s610 + $0x99] sm:$0xff]
        %v657 = vld [vmem:[%s610 + $0xa9] sm:$0xff]
        %v658 = vld [vmem:[%s610 + $0xb1] sm:$0xff]
        %v659 = vld [vmem:[%s610 + $0xc1] sm:$0xff]
        %v660 = vld [vmem:[%s610 + $0xc9] sm:$0xff]
        %v661 = vld [vmem:[%s610 + $0xd9] sm:$0xff]
        %v662 = vld [vmem:[%s610 + $0xe1] sm:$0xff]
        %v663 = vld [vmem:[%s610 + $0xf1] sm:$0xff]
        %v664 = vld [vmem:[%s610 + $0xf9] sm:$0xff]
        %v665 = vld [vmem:[%s610 + $0x109] sm:$0xff]
        %v666 = vld [vmem:[%s610 + $0x111] sm:$0xff]
        %v667 = vld [vmem:[%s610 + $0x121] sm:$0xff]
        %v668 = vld [vmem:[%s610 + $0x129] sm:$0xff]
        %v669 = vld [vmem:[%s610 + $0x139] sm:$0xff]
        %v670 = vld [vmem:[%s610 + $0x141] sm:$0xff]
        %v671 = vld [vmem:[%s610 + $0x151] sm:$0xff]
        %v672 = vld [vmem:[%s610 + $0x159] sm:$0xff]
        %v673 = vld [vmem:[%s610 + $0x169] sm:$0xff]
        %v674 = vld [vmem:[%s610 + $0x171] sm:$0xff]
        %v675 = vld [vmem:[%s610 + $0x2] sm:$0xff]
        %v676 = vld [vmem:[%s610 + $0xa] sm:$0xff]
        %v677 = vld [vmem:[%s610 + $0x1a] sm:$0xff]
        %v678 = vld [vmem:[%s610 + $0x22] sm:$0xff]
        %v679 = vld [vmem:[%s610 + $0x32] sm:$0xff]
        %v680 = vld [vmem:[%s610 + $0x3a] sm:$0xff]
        %v681 = vld [vmem:[%s610 + $0x4a] sm:$0xff]
        %v682 = vld [vmem:[%s610 + $0x52] sm:$0xff]
        %v683 = vld [vmem:[%s610 + $0x62] sm:$0xff]
        %v684 = vld [vmem:[%s610 + $0x6a] sm:$0xff]
        %v685 = vld [vmem:[%s610 + $0x7a] sm:$0xff]
        %v686 = vld [vmem:[%s610 + $0x82] sm:$0xff]
        %v687 = vld [vmem:[%s610 + $0x92] sm:$0xff]
        %v688 = vld [vmem:[%s610 + $0x9a] sm:$0xff]
        %v689 = vld [vmem:[%s610 + $0xaa] sm:$0xff]
        %v690 = vld [vmem:[%s610 + $0xb2] sm:$0xff]
        %v691 = vld [vmem:[%s610 + $0xc2] sm:$0xff]
        %v692 = vld [vmem:[%s610 + $0xca] sm:$0xff]
        %v693 = vld [vmem:[%s610 + $0xda] sm:$0xff]
        %v694 = vld [vmem:[%s610 + $0xe2] sm:$0xff]
        %v695 = vld [vmem:[%s610 + $0xf2] sm:$0xff]
        %v696 = vld [vmem:[%s610 + $0xfa] sm:$0xff]
        %v697 = vld [vmem:[%s610 + $0x10a] sm:$0xff]
        %v698 = vld [vmem:[%s610 + $0x112] sm:$0xff]
        %v699 = vld [vmem:[%s610 + $0x122] sm:$0xff]
        %v700 = vld [vmem:[%s610 + $0x12a] sm:$0xff]
        %v701 = vld [vmem:[%s610 + $0x13a] sm:$0xff]
        %v702 = vld [vmem:[%s610 + $0x142] sm:$0xff]
        %v703 = vld [vmem:[%s610 + $0x152] sm:$0xff]
        %v704 = vld [vmem:[%s610 + $0x15a] sm:$0xff]
        %v705 = vld [vmem:[%s610 + $0x16a] sm:$0xff]
        %v706 = vld [vmem:[%s610 + $0x172] sm:$0xff]
        %739 = vrot.lane.b32.xlu0 %v445, 4
        %v740 = vpop.permute.xlu0 %739
        %741 = vrot.lane.b32.xlu0 %v446, 4
        %v742 = vpop.permute.xlu0 %741
        %743 = vrot.lane.b32.xlu0 %v447, 4
        %v744 = vpop.permute.xlu0 %743
        %745 = vrot.lane.b32.xlu0 %v448, 4
        %v746 = vpop.permute.xlu0 %745
        %747 = vrot.lane.b32.xlu0 %v449, 4
        %v748 = vpop.permute.xlu0 %747
        %749 = vrot.lane.b32.xlu0 %v450, 4
        %v750 = vpop.permute.xlu0 %749
        %751 = vrot.lane.b32.xlu0 %v451, 4
        %v752 = vpop.permute.xlu0 %751
        %753 = vrot.lane.b32.xlu0 %v452, 4
        %v754 = vpop.permute.xlu0 %753
        %755 = vrot.lane.b32.xlu0 %v453, 4
        %v756 = vpop.permute.xlu0 %755
        %757 = vrot.lane.b32.xlu0 %v454, 4
        %v758 = vpop.permute.xlu0 %757
        %759 = vrot.lane.b32.xlu0 %v455, 4
        %v760 = vpop.permute.xlu0 %759
        %761 = vrot.lane.b32.xlu0 %v456, 4
        %v762 = vpop.permute.xlu0 %761
        %763 = vrot.lane.b32.xlu0 %v457, 4
        %v764 = vpop.permute.xlu0 %763
        %765 = vrot.lane.b32.xlu0 %v458, 4
        %v766 = vpop.permute.xlu0 %765
        %767 = vrot.lane.b32.xlu0 %v459, 4
        %v768 = vpop.permute.xlu0 %767
        %769 = vrot.lane.b32.xlu0 %v460, 4
        %v770 = vpop.permute.xlu0 %769
        %771 = vrot.lane.b32.xlu0 %v461, 4
        %v772 = vpop.permute.xlu0 %771
        %773 = vrot.lane.b32.xlu0 %v462, 4
        %v774 = vpop.permute.xlu0 %773
        %775 = vrot.lane.b32.xlu0 %v463, 4
        %v776 = vpop.permute.xlu0 %775
        %777 = vrot.lane.b32.xlu0 %v464, 4
        %v778 = vpop.permute.xlu0 %777
        %779 = vrot.lane.b32.xlu0 %v465, 4
        %v780 = vpop.permute.xlu0 %779
        %781 = vrot.lane.b32.xlu0 %v466, 4
        %v782 = vpop.permute.xlu0 %781
        %783 = vrot.lane.b32.xlu0 %v467, 4
        %v784 = vpop.permute.xlu0 %783
        %785 = vrot.lane.b32.xlu0 %v468, 4
        %v786 = vpop.permute.xlu0 %785
        %787 = vrot.lane.b32.xlu0 %v469, 4
        %v788 = vpop.permute.xlu0 %787
        %789 = vrot.lane.b32.xlu0 %v470, 4
        %v790 = vpop.permute.xlu0 %789
        %791 = vrot.lane.b32.xlu0 %v471, 4
        %v792 = vpop.permute.xlu0 %791
        %793 = vrot.lane.b32.xlu0 %v472, 4
        %v794 = vpop.permute.xlu0 %793
        %795 = vrot.lane.b32.xlu0 %v473, 4
        %v796 = vpop.permute.xlu0 %795
        %797 = vrot.lane.b32.xlu0 %v474, 4
        %v798 = vpop.permute.xlu0 %797
        %799 = vrot.lane.b32.xlu0 %v475, 4
        %v800 = vpop.permute.xlu0 %799
        %801 = vrot.lane.b32.xlu0 %v476, 4
        %v802 = vpop.permute.xlu0 %801
        %867 = vrot.lane.b32.xlu0 %v477, 8
        %v868 = vpop.permute.xlu0 %867
        %869 = vrot.lane.b32.xlu0 %v478, 8
        %v870 = vpop.permute.xlu0 %869
        %871 = vrot.lane.b32.xlu0 %v479, 8
        %v872 = vpop.permute.xlu0 %871
        %873 = vrot.lane.b32.xlu0 %v480, 8
        %v874 = vpop.permute.xlu0 %873
        %875 = vrot.lane.b32.xlu0 %v481, 8
        %v876 = vpop.permute.xlu0 %875
        %877 = vrot.lane.b32.xlu0 %v482, 8
        %v878 = vpop.permute.xlu0 %877
        %879 = vrot.lane.b32.xlu0 %v483, 8
        %v880 = vpop.permute.xlu0 %879
        %881 = vrot.lane.b32.xlu0 %v484, 8
        %v882 = vpop.permute.xlu0 %881
        %883 = vrot.lane.b32.xlu0 %v485, 8
        %v884 = vpop.permute.xlu0 %883
        %885 = vrot.lane.b32.xlu0 %v486, 8
        %v886 = vpop.permute.xlu0 %885
        %887 = vrot.lane.b32.xlu0 %v487, 8
        %v888 = vpop.permute.xlu0 %887
        %889 = vrot.lane.b32.xlu0 %v488, 8
        %v890 = vpop.permute.xlu0 %889
        %891 = vrot.lane.b32.xlu0 %v489, 8
        %v892 = vpop.permute.xlu0 %891
        %893 = vrot.lane.b32.xlu0 %v490, 8
        %v894 = vpop.permute.xlu0 %893
        %895 = vrot.lane.b32.xlu0 %v491, 8
        %v896 = vpop.permute.xlu0 %895
        %897 = vrot.lane.b32.xlu0 %v492, 8
        %v898 = vpop.permute.xlu0 %897
        %899 = vrot.lane.b32.xlu0 %v493, 8
        %v900 = vpop.permute.xlu0 %899
        %901 = vrot.lane.b32.xlu0 %v494, 8
        %v902 = vpop.permute.xlu0 %901
        %903 = vrot.lane.b32.xlu0 %v495, 8
        %v904 = vpop.permute.xlu0 %903
        %905 = vrot.lane.b32.xlu0 %v496, 8
        %v906 = vpop.permute.xlu0 %905
        %907 = vrot.lane.b32.xlu0 %v497, 8
        %v908 = vpop.permute.xlu0 %907
        %909 = vrot.lane.b32.xlu0 %v498, 8
        %v910 = vpop.permute.xlu0 %909
        %911 = vrot.lane.b32.xlu0 %v499, 8
        %v912 = vpop.permute.xlu0 %911
        %913 = vrot.lane.b32.xlu0 %v500, 8
        %v914 = vpop.permute.xlu0 %913
        %915 = vrot.lane.b32.xlu0 %v501, 8
        %v916 = vpop.permute.xlu0 %915
        %917 = vrot.lane.b32.xlu0 %v502, 8
        %v918 = vpop.permute.xlu0 %917
        %919 = vrot.lane.b32.xlu0 %v503, 8
        %v920 = vpop.permute.xlu0 %919
        %921 = vrot.lane.b32.xlu0 %v504, 8
        %v922 = vpop.permute.xlu0 %921
        %923 = vrot.lane.b32.xlu0 %v505, 8
        %v924 = vpop.permute.xlu0 %923
        %925 = vrot.lane.b32.xlu0 %v506, 8
        %v926 = vpop.permute.xlu0 %925
        %927 = vrot.lane.b32.xlu0 %v507, 8
        %v928 = vpop.permute.xlu0 %927
        %929 = vrot.lane.b32.xlu0 %v508, 8
        %v930 = vpop.permute.xlu0 %929
        %995 = vrot.lane.b32.xlu0 %v512, 12
        %v996 = vpop.permute.xlu0 %995
        %997 = vrot.lane.b32.xlu0 %v513, 12
        %v998 = vpop.permute.xlu0 %997
        %999 = vrot.lane.b32.xlu0 %v514, 12
        %v1000 = vpop.permute.xlu0 %999
        %1001 = vrot.lane.b32.xlu0 %v515, 12
        %v1002 = vpop.permute.xlu0 %1001
        %1003 = vrot.lane.b32.xlu0 %v516, 12
        %v1004 = vpop.permute.xlu0 %1003
        %1005 = vrot.lane.b32.xlu0 %v517, 12
        %v1006 = vpop.permute.xlu0 %1005
        %1007 = vrot.lane.b32.xlu0 %v518, 12
        %v1008 = vpop.permute.xlu0 %1007
        %1009 = vrot.lane.b32.xlu0 %v519, 12
        %v1010 = vpop.permute.xlu0 %1009
        %1011 = vrot.lane.b32.xlu0 %v520, 12
        %v1012 = vpop.permute.xlu0 %1011
        %1013 = vrot.lane.b32.xlu0 %v521, 12
        %v1014 = vpop.permute.xlu0 %1013
        %1015 = vrot.lane.b32.xlu0 %v522, 12
        %v1016 = vpop.permute.xlu0 %1015
        %1017 = vrot.lane.b32.xlu0 %v523, 12
        %v1018 = vpop.permute.xlu0 %1017
        %1019 = vrot.lane.b32.xlu0 %v524, 12
        %v1020 = vpop.permute.xlu0 %1019
        %1021 = vrot.lane.b32.xlu0 %v525, 12
        %v1022 = vpop.permute.xlu0 %1021
        %1023 = vrot.lane.b32.xlu0 %v526, 12
        %v1024 = vpop.permute.xlu0 %1023
        %1025 = vrot.lane.b32.xlu0 %v527, 12
        %v1026 = vpop.permute.xlu0 %1025
        %1027 = vrot.lane.b32.xlu0 %v528, 12
        %v1028 = vpop.permute.xlu0 %1027
        %1029 = vrot.lane.b32.xlu0 %v529, 12
        %v1030 = vpop.permute.xlu0 %1029
        %1031 = vrot.lane.b32.xlu0 %v530, 12
        %v1032 = vpop.permute.xlu0 %1031
        %1033 = vrot.lane.b32.xlu0 %v531, 12
        %v1034 = vpop.permute.xlu0 %1033
        %1035 = vrot.lane.b32.xlu0 %v532, 12
        %v1036 = vpop.permute.xlu0 %1035
        %1037 = vrot.lane.b32.xlu0 %v533, 12
        %v1038 = vpop.permute.xlu0 %1037
        %1039 = vrot.lane.b32.xlu0 %v534, 12
        %v1040 = vpop.permute.xlu0 %1039
        %1041 = vrot.lane.b32.xlu0 %v535, 12
        %v1042 = vpop.permute.xlu0 %1041
        %1043 = vrot.lane.b32.xlu0 %v536, 12
        %v1044 = vpop.permute.xlu0 %1043
        %1045 = vrot.lane.b32.xlu0 %v537, 12
        %v1046 = vpop.permute.xlu0 %1045
        %1047 = vrot.lane.b32.xlu0 %v538, 12
        %v1048 = vpop.permute.xlu0 %1047
        %1049 = vrot.lane.b32.xlu0 %v539, 12
        %v1050 = vpop.permute.xlu0 %1049
        %1051 = vrot.lane.b32.xlu0 %v540, 12
        %v1052 = vpop.permute.xlu0 %1051
        %1053 = vrot.lane.b32.xlu0 %v541, 12
        %v1054 = vpop.permute.xlu0 %1053
        %1055 = vrot.lane.b32.xlu0 %v542, 12
        %v1056 = vpop.permute.xlu0 %1055
        %1057 = vrot.lane.b32.xlu0 %v543, 12
        %v1058 = vpop.permute.xlu0 %1057
        %1123 = vrot.lane.b32.xlu0 %v544, 16
        %v1124 = vpop.permute.xlu0 %1123
        %1125 = vrot.lane.b32.xlu0 %v545, 16
        %v1126 = vpop.permute.xlu0 %1125
        %1127 = vrot.lane.b32.xlu0 %v546, 16
        %v1128 = vpop.permute.xlu0 %1127
        %1129 = vrot.lane.b32.xlu0 %v547, 16
        %v1130 = vpop.permute.xlu0 %1129
        %1131 = vrot.lane.b32.xlu0 %v548, 16
        %v1132 = vpop.permute.xlu0 %1131
        %1133 = vrot.lane.b32.xlu0 %v549, 16
        %v1134 = vpop.permute.xlu0 %1133
        %1135 = vrot.lane.b32.xlu0 %v550, 16
        %v1136 = vpop.permute.xlu0 %1135
        %1137 = vrot.lane.b32.xlu0 %v551, 16
        %v1138 = vpop.permute.xlu0 %1137
        %1139 = vrot.lane.b32.xlu0 %v552, 16
        %v1140 = vpop.permute.xlu0 %1139
        %1141 = vrot.lane.b32.xlu0 %v553, 16
        %v1142 = vpop.permute.xlu0 %1141
        %1143 = vrot.lane.b32.xlu0 %v554, 16
        %v1144 = vpop.permute.xlu0 %1143
        %1145 = vrot.lane.b32.xlu0 %v555, 16
        %v1146 = vpop.permute.xlu0 %1145
        %1147 = vrot.lane.b32.xlu0 %v556, 16
        %v1148 = vpop.permute.xlu0 %1147
        %1149 = vrot.lane.b32.xlu0 %v557, 16
        %v1150 = vpop.permute.xlu0 %1149
        %1151 = vrot.lane.b32.xlu0 %v558, 16
        %v1152 = vpop.permute.xlu0 %1151
        %1153 = vrot.lane.b32.xlu0 %v559, 16
        %v1154 = vpop.permute.xlu0 %1153
        %1155 = vrot.lane.b32.xlu0 %v560, 16
        %v1156 = vpop.permute.xlu0 %1155
        %1157 = vrot.lane.b32.xlu0 %v561, 16
        %v1158 = vpop.permute.xlu0 %1157
        %1159 = vrot.lane.b32.xlu0 %v562, 16
        %v1160 = vpop.permute.xlu0 %1159
        %1161 = vrot.lane.b32.xlu0 %v563, 16
        %v1162 = vpop.permute.xlu0 %1161
        %1163 = vrot.lane.b32.xlu0 %v564, 16
        %v1164 = vpop.permute.xlu0 %1163
        %1165 = vrot.lane.b32.xlu0 %v565, 16
        %v1166 = vpop.permute.xlu0 %1165
        %1167 = vrot.lane.b32.xlu0 %v566, 16
        %v1168 = vpop.permute.xlu0 %1167
        %1169 = vrot.lane.b32.xlu0 %v567, 16
        %v1170 = vpop.permute.xlu0 %1169
        %1171 = vrot.lane.b32.xlu0 %v568, 16
        %v1172 = vpop.permute.xlu0 %1171
        %1173 = vrot.lane.b32.xlu0 %v569, 16
        %v1174 = vpop.permute.xlu0 %1173
        %1175 = vrot.lane.b32.xlu0 %v570, 16
        %v1176 = vpop.permute.xlu0 %1175
        %1177 = vrot.lane.b32.xlu0 %v571, 16
        %v1178 = vpop.permute.xlu0 %1177
        %1179 = vrot.lane.b32.xlu0 %v572, 16
        %v1180 = vpop.permute.xlu0 %1179
        %1181 = vrot.lane.b32.xlu0 %v573, 16
        %v1182 = vpop.permute.xlu0 %1181
        %1183 = vrot.lane.b32.xlu0 %v574, 16
        %v1184 = vpop.permute.xlu0 %1183
        %1185 = vrot.lane.b32.xlu0 %v575, 16
        %v1186 = vpop.permute.xlu0 %1185
        %1251 = vrot.lane.b32.xlu0 %v576, 20
        %v1252 = vpop.permute.xlu0 %1251
        %1253 = vrot.lane.b32.xlu0 %v577, 20
        %v1254 = vpop.permute.xlu0 %1253
        %1255 = vrot.lane.b32.xlu0 %v578, 20
        %v1256 = vpop.permute.xlu0 %1255
        %1257 = vrot.lane.b32.xlu0 %v579, 20
        %v1258 = vpop.permute.xlu0 %1257
        %1259 = vrot.lane.b32.xlu0 %v580, 20
        %v1260 = vpop.permute.xlu0 %1259
        %1261 = vrot.lane.b32.xlu0 %v581, 20
        %v1262 = vpop.permute.xlu0 %1261
        %1263 = vrot.lane.b32.xlu0 %v582, 20
        %v1264 = vpop.permute.xlu0 %1263
        %1265 = vrot.lane.b32.xlu0 %v583, 20
        %v1266 = vpop.permute.xlu0 %1265
        %1267 = vrot.lane.b32.xlu0 %v584, 20
        %v1268 = vpop.permute.xlu0 %1267
        %1269 = vrot.lane.b32.xlu0 %v585, 20
        %v1270 = vpop.permute.xlu0 %1269
        %1271 = vrot.lane.b32.xlu0 %v586, 20
        %v1272 = vpop.permute.xlu0 %1271
        %1273 = vrot.lane.b32.xlu0 %v587, 20
        %v1274 = vpop.permute.xlu0 %1273
        %1275 = vrot.lane.b32.xlu0 %v588, 20
        %v1276 = vpop.permute.xlu0 %1275
        %1277 = vrot.lane.b32.xlu0 %v589, 20
        %v1278 = vpop.permute.xlu0 %1277
        %1279 = vrot.lane.b32.xlu0 %v590, 20
        %v1280 = vpop.permute.xlu0 %1279
        %1281 = vrot.lane.b32.xlu0 %v591, 20
        %v1282 = vpop.permute.xlu0 %1281
        %1283 = vrot.lane.b32.xlu0 %v592, 20
        %v1284 = vpop.permute.xlu0 %1283
        %1285 = vrot.lane.b32.xlu0 %v593, 20
        %v1286 = vpop.permute.xlu0 %1285
        %1287 = vrot.lane.b32.xlu0 %v594, 20
        %v1288 = vpop.permute.xlu0 %1287
        %1289 = vrot.lane.b32.xlu0 %v595, 20
        %v1290 = vpop.permute.xlu0 %1289
        %1291 = vrot.lane.b32.xlu0 %v596, 20
        %v1292 = vpop.permute.xlu0 %1291
        %1293 = vrot.lane.b32.xlu0 %v597, 20
        %v1294 = vpop.permute.xlu0 %1293
        %1295 = vrot.lane.b32.xlu0 %v598, 20
        %v1296 = vpop.permute.xlu0 %1295
        %1297 = vrot.lane.b32.xlu0 %v599, 20
        %v1298 = vpop.permute.xlu0 %1297
        %1299 = vrot.lane.b32.xlu0 %v600, 20
        %v1300 = vpop.permute.xlu0 %1299
        %1301 = vrot.lane.b32.xlu0 %v601, 20
        %v1302 = vpop.permute.xlu0 %1301
        %1303 = vrot.lane.b32.xlu0 %v602, 20
        %v1304 = vpop.permute.xlu0 %1303
        %1305 = vrot.lane.b32.xlu0 %v603, 20
        %v1306 = vpop.permute.xlu0 %1305
        %1307 = vrot.lane.b32.xlu0 %v604, 20
        %v1308 = vpop.permute.xlu0 %1307
        %1309 = vrot.lane.b32.xlu0 %v605, 20
        %v1310 = vpop.permute.xlu0 %1309
        %1311 = vrot.lane.b32.xlu0 %v606, 20
        %v1312 = vpop.permute.xlu0 %1311
        %1313 = vrot.lane.b32.xlu0 %v607, 20
        %v1314 = vpop.permute.xlu0 %1313
        %1379 = vrot.lane.b32.xlu0 %v611, 24
        %v1380 = vpop.permute.xlu0 %1379
        %1381 = vrot.lane.b32.xlu0 %v612, 24
        %v1382 = vpop.permute.xlu0 %1381
        %1383 = vrot.lane.b32.xlu0 %v613, 24
        %v1384 = vpop.permute.xlu0 %1383
        %1385 = vrot.lane.b32.xlu0 %v614, 24
        %v1386 = vpop.permute.xlu0 %1385
        %1387 = vrot.lane.b32.xlu0 %v615, 24
        %v1388 = vpop.permute.xlu0 %1387
        %1389 = vrot.lane.b32.xlu0 %v616, 24
        %v1390 = vpop.permute.xlu0 %1389
        %1391 = vrot.lane.b32.xlu0 %v617, 24
        %v1392 = vpop.permute.xlu0 %1391
        %1393 = vrot.lane.b32.xlu0 %v618, 24
        %v1394 = vpop.permute.xlu0 %1393
        %1395 = vrot.lane.b32.xlu0 %v619, 24
        %v1396 = vpop.permute.xlu0 %1395
        %1397 = vrot.lane.b32.xlu0 %v620, 24
        %v1398 = vpop.permute.xlu0 %1397
        %1399 = vrot.lane.b32.xlu0 %v621, 24
        %v1400 = vpop.permute.xlu0 %1399
        %1401 = vrot.lane.b32.xlu0 %v622, 24
        %v1402 = vpop.permute.xlu0 %1401
        %1403 = vrot.lane.b32.xlu0 %v623, 24
        %v1404 = vpop.permute.xlu0 %1403
        %1405 = vrot.lane.b32.xlu0 %v624, 24
        %v1406 = vpop.permute.xlu0 %1405
        %1407 = vrot.lane.b32.xlu0 %v625, 24
        %v1408 = vpop.permute.xlu0 %1407
        %1409 = vrot.lane.b32.xlu0 %v626, 24
        %v1410 = vpop.permute.xlu0 %1409
        %1411 = vrot.lane.b32.xlu0 %v627, 24
        %v1412 = vpop.permute.xlu0 %1411
        %1413 = vrot.lane.b32.xlu0 %v628, 24
        %v1414 = vpop.permute.xlu0 %1413
        %1415 = vrot.lane.b32.xlu0 %v629, 24
        %v1416 = vpop.permute.xlu0 %1415
        %1417 = vrot.lane.b32.xlu0 %v630, 24
        %v1418 = vpop.permute.xlu0 %1417
        %1419 = vrot.lane.b32.xlu0 %v631, 24
        %v1420 = vpop.permute.xlu0 %1419
        %1421 = vrot.lane.b32.xlu0 %v632, 24
        %v1422 = vpop.permute.xlu0 %1421
        %1423 = vrot.lane.b32.xlu0 %v633, 24
        %v1424 = vpop.permute.xlu0 %1423
        %1425 = vrot.lane.b32.xlu0 %v634, 24
        %v1426 = vpop.permute.xlu0 %1425
        %1427 = vrot.lane.b32.xlu0 %v635, 24
        %v1428 = vpop.permute.xlu0 %1427
        %1429 = vrot.lane.b32.xlu0 %v636, 24
        %v1430 = vpop.permute.xlu0 %1429
        %1431 = vrot.lane.b32.xlu0 %v637, 24
        %v1432 = vpop.permute.xlu0 %1431
        %1433 = vrot.lane.b32.xlu0 %v638, 24
        %v1434 = vpop.permute.xlu0 %1433
        %1435 = vrot.lane.b32.xlu0 %v639, 24
        %v1436 = vpop.permute.xlu0 %1435
        %1437 = vrot.lane.b32.xlu0 %v640, 24
        %v1438 = vpop.permute.xlu0 %1437
        %1439 = vrot.lane.b32.xlu0 %v641, 24
        %v1440 = vpop.permute.xlu0 %1439
        %1441 = vrot.lane.b32.xlu0 %v642, 24
        %v1442 = vpop.permute.xlu0 %1441
        %1507 = vrot.lane.b32.xlu0 %v643, 28
        %v1508 = vpop.permute.xlu0 %1507
        %1509 = vrot.lane.b32.xlu0 %v644, 28
        %v1510 = vpop.permute.xlu0 %1509
        %1511 = vrot.lane.b32.xlu0 %v645, 28
        %v1512 = vpop.permute.xlu0 %1511
        %1513 = vrot.lane.b32.xlu0 %v646, 28
        %v1514 = vpop.permute.xlu0 %1513
        %1515 = vrot.lane.b32.xlu0 %v647, 28
        %v1516 = vpop.permute.xlu0 %1515
        %1517 = vrot.lane.b32.xlu0 %v648, 28
        %v1518 = vpop.permute.xlu0 %1517
        %1519 = vrot.lane.b32.xlu0 %v649, 28
        %v1520 = vpop.permute.xlu0 %1519
        %1521 = vrot.lane.b32.xlu0 %v650, 28
        %v1522 = vpop.permute.xlu0 %1521
        %1523 = vrot.lane.b32.xlu0 %v651, 28
        %v1524 = vpop.permute.xlu0 %1523
        %1525 = vrot.lane.b32.xlu0 %v652, 28
        %v1526 = vpop.permute.xlu0 %1525
        %1527 = vrot.lane.b32.xlu0 %v653, 28
        %v1528 = vpop.permute.xlu0 %1527
        %1529 = vrot.lane.b32.xlu0 %v654, 28
        %v1530 = vpop.permute.xlu0 %1529
        %1531 = vrot.lane.b32.xlu0 %v655, 28
        %v1532 = vpop.permute.xlu0 %1531
        %1533 = vrot.lane.b32.xlu0 %v656, 28
        %v1534 = vpop.permute.xlu0 %1533
        %1535 = vrot.lane.b32.xlu0 %v657, 28
        %v1536 = vpop.permute.xlu0 %1535
        %1537 = vrot.lane.b32.xlu0 %v658, 28
        %v1538 = vpop.permute.xlu0 %1537
        %1539 = vrot.lane.b32.xlu0 %v659, 28
        %v1540 = vpop.permute.xlu0 %1539
        %1541 = vrot.lane.b32.xlu0 %v660, 28
        %v1542 = vpop.permute.xlu0 %1541
        %1543 = vrot.lane.b32.xlu0 %v661, 28
        %v1544 = vpop.permute.xlu0 %1543
        %1545 = vrot.lane.b32.xlu0 %v662, 28
        %v1546 = vpop.permute.xlu0 %1545
        %1547 = vrot.lane.b32.xlu0 %v663, 28
        %v1548 = vpop.permute.xlu0 %1547
        %1549 = vrot.lane.b32.xlu0 %v664, 28
        %v1550 = vpop.permute.xlu0 %1549
        %1551 = vrot.lane.b32.xlu0 %v665, 28
        %v1552 = vpop.permute.xlu0 %1551
        %1553 = vrot.lane.b32.xlu0 %v666, 28
        %v1554 = vpop.permute.xlu0 %1553
        %1555 = vrot.lane.b32.xlu0 %v667, 28
        %v1556 = vpop.permute.xlu0 %1555
        %1557 = vrot.lane.b32.xlu0 %v668, 28
        %v1558 = vpop.permute.xlu0 %1557
        %1559 = vrot.lane.b32.xlu0 %v669, 28
        %v1560 = vpop.permute.xlu0 %1559
        %1561 = vrot.lane.b32.xlu0 %v670, 28
        %v1562 = vpop.permute.xlu0 %1561
        %1563 = vrot.lane.b32.xlu0 %v671, 28
        %v1564 = vpop.permute.xlu0 %1563
        %1565 = vrot.lane.b32.xlu0 %v672, 28
        %v1566 = vpop.permute.xlu0 %1565
        %1567 = vrot.lane.b32.xlu0 %v673, 28
        %v1568 = vpop.permute.xlu0 %1567
        %1569 = vrot.lane.b32.xlu0 %v674, 28
        %v1570 = vpop.permute.xlu0 %1569
        %1635 = vrot.lane.b32.xlu0 %v675, 32
        %v1636 = vpop.permute.xlu0 %1635
        %1637 = vrot.lane.b32.xlu0 %v676, 32
        %v1638 = vpop.permute.xlu0 %1637
        %1639 = vrot.lane.b32.xlu0 %v677, 32
        %v1640 = vpop.permute.xlu0 %1639
        %1641 = vrot.lane.b32.xlu0 %v678, 32
        %v1642 = vpop.permute.xlu0 %1641
        %1643 = vrot.lane.b32.xlu0 %v679, 32
        %v1644 = vpop.permute.xlu0 %1643
        %1645 = vrot.lane.b32.xlu0 %v680, 32
        %v1646 = vpop.permute.xlu0 %1645
        %1647 = vrot.lane.b32.xlu0 %v681, 32
        %v1648 = vpop.permute.xlu0 %1647
        %1649 = vrot.lane.b32.xlu0 %v682, 32
        %v1650 = vpop.permute.xlu0 %1649
        %1651 = vrot.lane.b32.xlu0 %v683, 32
        %v1652 = vpop.permute.xlu0 %1651
        %1653 = vrot.lane.b32.xlu0 %v684, 32
        %v1654 = vpop.permute.xlu0 %1653
        %1655 = vrot.lane.b32.xlu0 %v685, 32
        %v1656 = vpop.permute.xlu0 %1655
        %1657 = vrot.lane.b32.xlu0 %v686, 32
        %v1658 = vpop.permute.xlu0 %1657
        %1659 = vrot.lane.b32.xlu0 %v687, 32
        %v1660 = vpop.permute.xlu0 %1659
        %1661 = vrot.lane.b32.xlu0 %v688, 32
        %v1662 = vpop.permute.xlu0 %1661
        %1663 = vrot.lane.b32.xlu0 %v689, 32
        %v1664 = vpop.permute.xlu0 %1663
        %1665 = vrot.lane.b32.xlu0 %v690, 32
        %v1666 = vpop.permute.xlu0 %1665
        %1667 = vrot.lane.b32.xlu0 %v691, 32
        %v1668 = vpop.permute.xlu0 %1667
        %1669 = vrot.lane.b32.xlu0 %v692, 32
        %v1670 = vpop.permute.xlu0 %1669
        %1671 = vrot.lane.b32.xlu0 %v693, 32
        %v1672 = vpop.permute.xlu0 %1671
        %1673 = vrot.lane.b32.xlu0 %v694, 32
        %v1674 = vpop.permute.xlu0 %1673
        %1675 = vrot.lane.b32.xlu0 %v695, 32
        %v1676 = vpop.permute.xlu0 %1675
        %1677 = vrot.lane.b32.xlu0 %v696, 32
        %v1678 = vpop.permute.xlu0 %1677
        %1679 = vrot.lane.b32.xlu0 %v697, 32
        %v1680 = vpop.permute.xlu0 %1679
        %1681 = vrot.lane.b32.xlu0 %v698, 32
        %v1682 = vpop.permute.xlu0 %1681
        %1683 = vrot.lane.b32.xlu0 %v699, 32
        %v1684 = vpop.permute.xlu0 %1683
        %1685 = vrot.lane.b32.xlu0 %v700, 32
        %v1686 = vpop.permute.xlu0 %1685
        %1687 = vrot.lane.b32.xlu0 %v701, 32
        %v1688 = vpop.permute.xlu0 %1687
        %1689 = vrot.lane.b32.xlu0 %v702, 32
        %v1690 = vpop.permute.xlu0 %1689
        %1691 = vrot.lane.b32.xlu0 %v703, 32
        %v1692 = vpop.permute.xlu0 %1691
        %1693 = vrot.lane.b32.xlu0 %v704, 32
        %v1694 = vpop.permute.xlu0 %1693
        %1695 = vrot.lane.b32.xlu0 %v705, 32
        %v1696 = vpop.permute.xlu0 %1695
        %1697 = vrot.lane.b32.xlu0 %v706, 32
        %v1698 = vpop.permute.xlu0 %1697
        %vm1731 = vcmask 31744
        %v1732 = vsel %vm1731, %v413, %v740
        %v1733 = vsel %vm1731, %v414, %v742
        %v1734 = vsel %vm1731, %v415, %v744
        %v1735 = vsel %vm1731, %v416, %v746
        %v1736 = vsel %vm1731, %v417, %v748
        %v1737 = vsel %vm1731, %v418, %v750
        %v1738 = vsel %vm1731, %v419, %v752
        %v1739 = vsel %vm1731, %v420, %v754
        %v1740 = vsel %vm1731, %v421, %v756
        %v1741 = vsel %vm1731, %v422, %v758
        %v1742 = vsel %vm1731, %v423, %v760
        %v1743 = vsel %vm1731, %v424, %v762
        %v1744 = vsel %vm1731, %v425, %v764
        %v1745 = vsel %vm1731, %v426, %v766
        %v1746 = vsel %vm1731, %v427, %v768
        %v1747 = vsel %vm1731, %v428, %v770
        %v1748 = vsel %vm1731, %v429, %v772
        %v1749 = vsel %vm1731, %v430, %v774
        %v1750 = vsel %vm1731, %v431, %v776
        %v1751 = vsel %vm1731, %v432, %v778
        %v1752 = vsel %vm1731, %v433, %v780
        %v1753 = vsel %vm1731, %v434, %v782
        %v1754 = vsel %vm1731, %v435, %v784
        %v1755 = vsel %vm1731, %v436, %v786
        %v1756 = vsel %vm1731, %v437, %v788
        %v1757 = vsel %vm1731, %v438, %v790
        %v1758 = vsel %vm1731, %v439, %v792
        %v1759 = vsel %vm1731, %v440, %v794
        %v1760 = vsel %vm1731, %v441, %v796
        %v1761 = vsel %vm1731, %v442, %v798
        %v1762 = vsel %vm1731, %v443, %v800
        %v1763 = vsel %vm1731, %v444, %v802
        %vm1764 = vcmask 64512
        %v1765 = vsel %vm1764, %v1732, %v868
        %v1766 = vsel %vm1764, %v1733, %v870
        %v1767 = vsel %vm1764, %v1734, %v872
        %v1768 = vsel %vm1764, %v1735, %v874
        %v1769 = vsel %vm1764, %v1736, %v876
        %v1770 = vsel %vm1764, %v1737, %v878
        %v1771 = vsel %vm1764, %v1738, %v880
        %v1772 = vsel %vm1764, %v1739, %v882
        %v1773 = vsel %vm1764, %v1740, %v884
        %v1774 = vsel %vm1764, %v1741, %v886
        %v1775 = vsel %vm1764, %v1742, %v888
        %v1776 = vsel %vm1764, %v1743, %v890
        %v1777 = vsel %vm1764, %v1744, %v892
        %v1778 = vsel %vm1764, %v1745, %v894
        %v1779 = vsel %vm1764, %v1746, %v896
        %v1780 = vsel %vm1764, %v1747, %v898
        %v1781 = vsel %vm1764, %v1748, %v900
        %v1782 = vsel %vm1764, %v1749, %v902
        %v1783 = vsel %vm1764, %v1750, %v904
        %v1784 = vsel %vm1764, %v1751, %v906
        %v1785 = vsel %vm1764, %v1752, %v908
        %v1786 = vsel %vm1764, %v1753, %v910
        %v1787 = vsel %vm1764, %v1754, %v912
        %v1788 = vsel %vm1764, %v1755, %v914
        %v1789 = vsel %vm1764, %v1756, %v916
        %v1790 = vsel %vm1764, %v1757, %v918
        %v1791 = vsel %vm1764, %v1758, %v920
        %v1792 = vsel %vm1764, %v1759, %v922
        %v1793 = vsel %vm1764, %v1760, %v924
        %v1794 = vsel %vm1764, %v1761, %v926
        %v1795 = vsel %vm1764, %v1762, %v928
        %v1796 = vsel %vm1764, %v1763, %v930
        %vm1797 = vcmask 97280
        %v1798 = vsel %vm1797, %v1765, %v996
        %v1799 = vsel %vm1797, %v1766, %v998
        %v1800 = vsel %vm1797, %v1767, %v1000
        %v1801 = vsel %vm1797, %v1768, %v1002
        %v1802 = vsel %vm1797, %v1769, %v1004
        %v1803 = vsel %vm1797, %v1770, %v1006
        %v1804 = vsel %vm1797, %v1771, %v1008
        %v1805 = vsel %vm1797, %v1772, %v1010
        %v1806 = vsel %vm1797, %v1773, %v1012
        %v1807 = vsel %vm1797, %v1774, %v1014
        %v1808 = vsel %vm1797, %v1775, %v1016
        %v1809 = vsel %vm1797, %v1776, %v1018
        %v1810 = vsel %vm1797, %v1777, %v1020
        %v1811 = vsel %vm1797, %v1778, %v1022
        %v1812 = vsel %vm1797, %v1779, %v1024
        %v1813 = vsel %vm1797, %v1780, %v1026
        %v1814 = vsel %vm1797, %v1781, %v1028
        %v1815 = vsel %vm1797, %v1782, %v1030
        %v1816 = vsel %vm1797, %v1783, %v1032
        %v1817 = vsel %vm1797, %v1784, %v1034
        %v1818 = vsel %vm1797, %v1785, %v1036
        %v1819 = vsel %vm1797, %v1786, %v1038
        %v1820 = vsel %vm1797, %v1787, %v1040
        %v1821 = vsel %vm1797, %v1788, %v1042
        %v1822 = vsel %vm1797, %v1789, %v1044
        %v1823 = vsel %vm1797, %v1790, %v1046
        %v1824 = vsel %vm1797, %v1791, %v1048
        %v1825 = vsel %vm1797, %v1792, %v1050
        %v1826 = vsel %vm1797, %v1793, %v1052
        %v1827 = vsel %vm1797, %v1794, %v1054
        %v1828 = vsel %vm1797, %v1795, %v1056
        %v1829 = vsel %vm1797, %v1796, %v1058
        %vm1830 = vcmask 130048
        %v1831 = vsel %vm1830, %v1798, %v1124
        %v1832 = vsel %vm1830, %v1799, %v1126
        %v1833 = vsel %vm1830, %v1800, %v1128
        %v1834 = vsel %vm1830, %v1801, %v1130
        %v1835 = vsel %vm1830, %v1802, %v1132
        %v1836 = vsel %vm1830, %v1803, %v1134
        %v1837 = vsel %vm1830, %v1804, %v1136
        %v1838 = vsel %vm1830, %v1805, %v1138
        %v1839 = vsel %vm1830, %v1806, %v1140
        %v1840 = vsel %vm1830, %v1807, %v1142
        %v1841 = vsel %vm1830, %v1808, %v1144
        %v1842 = vsel %vm1830, %v1809, %v1146
        %v1843 = vsel %vm1830, %v1810, %v1148
        %v1844 = vsel %vm1830, %v1811, %v1150
        %v1845 = vsel %vm1830, %v1812, %v1152
        %v1846 = vsel %vm1830, %v1813, %v1154
        %v1847 = vsel %vm1830, %v1814, %v1156
        %v1848 = vsel %vm1830, %v1815, %v1158
        %v1849 = vsel %vm1830, %v1816, %v1160
        %v1850 = vsel %vm1830, %v1817, %v1162
        %v1851 = vsel %vm1830, %v1818, %v1164
        %v1852 = vsel %vm1830, %v1819, %v1166
        %v1853 = vsel %vm1830, %v1820, %v1168
        %v1854 = vsel %vm1830, %v1821, %v1170
        %v1855 = vsel %vm1830, %v1822, %v1172
        %v1856 = vsel %vm1830, %v1823, %v1174
        %v1857 = vsel %vm1830, %v1824, %v1176
        %v1858 = vsel %vm1830, %v1825, %v1178
        %v1859 = vsel %vm1830, %v1826, %v1180
        %v1860 = vsel %vm1830, %v1827, %v1182
        %v1861 = vsel %vm1830, %v1828, %v1184
        %v1862 = vsel %vm1830, %v1829, %v1186
        %vm1863 = vcmask 162816
        %v1864 = vsel %vm1863, %v1831, %v1252
        %v1865 = vsel %vm1863, %v1832, %v1254
        %v1866 = vsel %vm1863, %v1833, %v1256
        %v1867 = vsel %vm1863, %v1834, %v1258
        %v1868 = vsel %vm1863, %v1835, %v1260
        %v1869 = vsel %vm1863, %v1836, %v1262
        %v1870 = vsel %vm1863, %v1837, %v1264
        %v1871 = vsel %vm1863, %v1838, %v1266
        %v1872 = vsel %vm1863, %v1839, %v1268
        %v1873 = vsel %vm1863, %v1840, %v1270
        %v1874 = vsel %vm1863, %v1841, %v1272
        %v1875 = vsel %vm1863, %v1842, %v1274
        %v1876 = vsel %vm1863, %v1843, %v1276
        %v1877 = vsel %vm1863, %v1844, %v1278
        %v1878 = vsel %vm1863, %v1845, %v1280
        %v1879 = vsel %vm1863, %v1846, %v1282
        %v1880 = vsel %vm1863, %v1847, %v1284
        %v1881 = vsel %vm1863, %v1848, %v1286
        %v1882 = vsel %vm1863, %v1849, %v1288
        %v1883 = vsel %vm1863, %v1850, %v1290
        %v1884 = vsel %vm1863, %v1851, %v1292
        %v1885 = vsel %vm1863, %v1852, %v1294
        %v1886 = vsel %vm1863, %v1853, %v1296
        %v1887 = vsel %vm1863, %v1854, %v1298
        %v1888 = vsel %vm1863, %v1855, %v1300
        %v1889 = vsel %vm1863, %v1856, %v1302
        %v1890 = vsel %vm1863, %v1857, %v1304
        %v1891 = vsel %vm1863, %v1858, %v1306
        %v1892 = vsel %vm1863, %v1859, %v1308
        %v1893 = vsel %vm1863, %v1860, %v1310
        %v1894 = vsel %vm1863, %v1861, %v1312
        %v1895 = vsel %vm1863, %v1862, %v1314
        %vm1896 = vcmask 195584
        %v1897 = vsel %vm1896, %v1864, %v1380
        %v1898 = vsel %vm1896, %v1865, %v1382
        %v1899 = vsel %vm1896, %v1866, %v1384
        %v1900 = vsel %vm1896, %v1867, %v1386
        %v1901 = vsel %vm1896, %v1868, %v1388
        %v1902 = vsel %vm1896, %v1869, %v1390
        %v1903 = vsel %vm1896, %v1870, %v1392
        %v1904 = vsel %vm1896, %v1871, %v1394
        %v1905 = vsel %vm1896, %v1872, %v1396
        %v1906 = vsel %vm1896, %v1873, %v1398
        %v1907 = vsel %vm1896, %v1874, %v1400
        %v1908 = vsel %vm1896, %v1875, %v1402
        %v1909 = vsel %vm1896, %v1876, %v1404
        %v1910 = vsel %vm1896, %v1877, %v1406
        %v1911 = vsel %vm1896, %v1878, %v1408
        %v1912 = vsel %vm1896, %v1879, %v1410
        %v1913 = vsel %vm1896, %v1880, %v1412
        %v1914 = vsel %vm1896, %v1881, %v1414
        %v1915 = vsel %vm1896, %v1882, %v1416
        %v1916 = vsel %vm1896, %v1883, %v1418
        %v1917 = vsel %vm1896, %v1884, %v1420
        %v1918 = vsel %vm1896, %v1885, %v1422
        %v1919 = vsel %vm1896, %v1886, %v1424
        %v1920 = vsel %vm1896, %v1887, %v1426
        %v1921 = vsel %vm1896, %v1888, %v1428
        %v1922 = vsel %vm1896, %v1889, %v1430
        %v1923 = vsel %vm1896, %v1890, %v1432
        %v1924 = vsel %vm1896, %v1891, %v1434
        %v1925 = vsel %vm1896, %v1892, %v1436
        %v1926 = vsel %vm1896, %v1893, %v1438
        %v1927 = vsel %vm1896, %v1894, %v1440
        %v1928 = vsel %vm1896, %v1895, %v1442
        %vm1929 = vcmask 228352
        %v1930 = vsel %vm1929, %v1897, %v1508
        %v1931 = vsel %vm1929, %v1898, %v1510
        %v1932 = vsel %vm1929, %v1899, %v1512
        %v1933 = vsel %vm1929, %v1900, %v1514
        %v1934 = vsel %vm1929, %v1901, %v1516
        %v1935 = vsel %vm1929, %v1902, %v1518
        %v1936 = vsel %vm1929, %v1903, %v1520
        %v1937 = vsel %vm1929, %v1904, %v1522
        %v1938 = vsel %vm1929, %v1905, %v1524
        %v1939 = vsel %vm1929, %v1906, %v1526
        %v1940 = vsel %vm1929, %v1907, %v1528
        %v1941 = vsel %vm1929, %v1908, %v1530
        %v1942 = vsel %vm1929, %v1909, %v1532
        %v1943 = vsel %vm1929, %v1910, %v1534
        %v1944 = vsel %vm1929, %v1911, %v1536
        %v1945 = vsel %vm1929, %v1912, %v1538
        %v1946 = vsel %vm1929, %v1913, %v1540
        %v1947 = vsel %vm1929, %v1914, %v1542
        %v1948 = vsel %vm1929, %v1915, %v1544
        %v1949 = vsel %vm1929, %v1916, %v1546
        %v1950 = vsel %vm1929, %v1917, %v1548
        %v1951 = vsel %vm1929, %v1918, %v1550
        %v1952 = vsel %vm1929, %v1919, %v1552
        %v1953 = vsel %vm1929, %v1920, %v1554
        %v1954 = vsel %vm1929, %v1921, %v1556
        %v1955 = vsel %vm1929, %v1922, %v1558
        %v1956 = vsel %vm1929, %v1923, %v1560
        %v1957 = vsel %vm1929, %v1924, %v1562
        %v1958 = vsel %vm1929, %v1925, %v1564
        %v1959 = vsel %vm1929, %v1926, %v1566
        %v1960 = vsel %vm1929, %v1927, %v1568
        %v1961 = vsel %vm1929, %v1928, %v1570
        %vm1962 = vcmask 261120
        %v1963 = vsel %vm1962, %v1930, %v1636
        %v1964 = vsel %vm1962, %v1931, %v1638
        %v1965 = vsel %vm1962, %v1932, %v1640
        %v1966 = vsel %vm1962, %v1933, %v1642
        %v1967 = vsel %vm1962, %v1934, %v1644
        %v1968 = vsel %vm1962, %v1935, %v1646
        %v1969 = vsel %vm1962, %v1936, %v1648
        %v1970 = vsel %vm1962, %v1937, %v1650
        %v1971 = vsel %vm1962, %v1938, %v1652
        %v1972 = vsel %vm1962, %v1939, %v1654
        %v1973 = vsel %vm1962, %v1940, %v1656
        %v1974 = vsel %vm1962, %v1941, %v1658
        %v1975 = vsel %vm1962, %v1942, %v1660
        %v1976 = vsel %vm1962, %v1943, %v1662
        %v1977 = vsel %vm1962, %v1944, %v1664
        %v1978 = vsel %vm1962, %v1945, %v1666
        %v1979 = vsel %vm1962, %v1946, %v1668
        %v1980 = vsel %vm1962, %v1947, %v1670
        %v1981 = vsel %vm1962, %v1948, %v1672
        %v1982 = vsel %vm1962, %v1949, %v1674
        %v1983 = vsel %vm1962, %v1950, %v1676
        %v1984 = vsel %vm1962, %v1951, %v1678
        %v1985 = vsel %vm1962, %v1952, %v1680
        %v1986 = vsel %vm1962, %v1953, %v1682
        %v1987 = vsel %vm1962, %v1954, %v1684
        %v1988 = vsel %vm1962, %v1955, %v1686
        %v1989 = vsel %vm1962, %v1956, %v1688
        %v1990 = vsel %vm1962, %v1957, %v1690
        %v1991 = vsel %vm1962, %v1958, %v1692
        %v1992 = vsel %vm1962, %v1959, %v1694
        %v1993 = vsel %vm1962, %v1960, %v1696
        %v1994 = vsel %vm1962, %v1961, %v1698
        %v1995 = vld [vmem:[%s3] sm:$0xff]
        %v1996 = vld [vmem:[%s3 + $0x8] sm:$0xff]
        %v1997 = vld [vmem:[%s3 + $0x10] sm:$0xff]
        %v1998 = vld [vmem:[%s3 + $0x18] sm:$0xff]
        %v1999 = vld [vmem:[%s3 + $0x20] sm:$0xf]
        %vm2000 = vcmask 293888
        %v2002 = vsel %vm2000, %v1963, 0
        %v2005 = vsel %vm2000, %v1964, 0
        %v2008 = vsel %vm2000, %v1965, 0
        %v2011 = vsel %vm2000, %v1966, 0
        %v2014 = vsel %vm2000, %v1967, 0
        %v2017 = vsel %vm2000, %v1968, 0
        %v2020 = vsel %vm2000, %v1969, 0
        %v2023 = vsel %vm2000, %v1970, 0
        %v2026 = vsel %vm2000, %v1971, 0
        %v2029 = vsel %vm2000, %v1972, 0
        %v2032 = vsel %vm2000, %v1973, 0
        %v2035 = vsel %vm2000, %v1974, 0
        %v2038 = vsel %vm2000, %v1975, 0
        %v2041 = vsel %vm2000, %v1976, 0
        %v2044 = vsel %vm2000, %v1977, 0
        %v2047 = vsel %vm2000, %v1978, 0
        %v2050 = vsel %vm2000, %v1979, 0
        %v2053 = vsel %vm2000, %v1980, 0
        %v2056 = vsel %vm2000, %v1981, 0
        %v2059 = vsel %vm2000, %v1982, 0
        %v2062 = vsel %vm2000, %v1983, 0
        %v2065 = vsel %vm2000, %v1984, 0
        %v2068 = vsel %vm2000, %v1985, 0
        %v2071 = vsel %vm2000, %v1986, 0
        %v2074 = vsel %vm2000, %v1987, 0
        %v2077 = vsel %vm2000, %v1988, 0
        %v2080 = vsel %vm2000, %v1989, 0
        %v2083 = vsel %vm2000, %v1990, 0
        %v2086 = vsel %vm2000, %v1991, 0
        %v2089 = vsel %vm2000, %v1992, 0
        %v2092 = vsel %vm2000, %v1993, 0
        %v2095 = vsel %vm2000, %v1994, 0
        %vm2097 = vcmask 1043456
        %v2099 = vsel %vm2097, %v1999, 0
        %2101 = vmatprep.subr.mxu0 0.0
        %2102 = vmatpush1.msra.mxu0 0.0
        %2103 = vmatprep.subr.mxu0 0.0
        %2104 = vmatpush1.msra.mxu0 0.0
        %2105 = vmatprep.subr.mxu0 0.0
        %2106 = vmatpush1.msra.mxu0 0.0
        %2107 = vmatprep.subr.mxu0 0.0
        %2108 = vmatpush1.msra.mxu0 0.0
        %2109 = vmatprep.subr.mxu0 0.0
        %2110 = vmatpush1.msra.mxu0 0.0
        %2111 = vmatprep.subr.mxu0 0.0
        %2112 = vmatpush1.msra.mxu0 0.0
        %2113 = vmatprep.subr.mxu0 0.0
        %2114 = vmatpush1.msra.mxu0 0.0
        %2115 = vmatprep.subr.mxu0 0.0
        %2116 = vmatpush1.msra.mxu0 0.0
        %2117 = vmatprep.subr.mxu0 0.0
        %2118 = vmatpush1.msra.mxu0 0.0
        %2119 = vmatprep.subr.mxu0 0.0
        %2120 = vmatpush1.msra.mxu0 0.0
        %2121 = vmatprep.subr.mxu0 0.0
        %2122 = vmatpush1.msra.mxu0 0.0
        %2123 = vmatprep.subr.mxu0 0.0
        %2124 = vmatpush1.msra.mxu0 %v2099
        %2125 = vmatprep.subr.mxu0 0.0
        %2126 = vmatpush1.msra.mxu0 %v1998
        %2127 = vmatprep.subr.mxu0 0.0
        %2128 = vmatpush1.msra.mxu0 %v1997
        %2129 = vmatprep.subr.mxu0 0.0
        %2130 = vmatpush1.msra.mxu0 %v1996
        %2131 = vmatprep.subr.mxu0 0.0
        %2132 = vmatpush1.msra.mxu0 %v1995
        %2133 = vmatprep.subr.mxu0 0.0
        %2134 = vmatpush2.msra.mxu0 0.0
        %2135 = vmatprep.subr.mxu0 0.0
        %2136 = vmatpush2.msra.mxu0 0.0
        %2137 = vmatprep.subr.mxu0 0.0
        %2138 = vmatpush2.msra.mxu0 0.0
        %2139 = vmatprep.subr.mxu0 0.0
        %2140 = vmatpush2.msra.mxu0 0.0
        %2141 = vmatprep.subr.mxu0 0.0
        %2142 = vmatpush2.msra.mxu0 0.0
        %2143 = vmatprep.subr.mxu0 0.0
        %2144 = vmatpush2.msra.mxu0 0.0
        %2145 = vmatprep.subr.mxu0 0.0
        %2146 = vmatpush2.msra.mxu0 0.0
        %2147 = vmatprep.subr.mxu0 0.0
        %2148 = vmatpush2.msra.mxu0 0.0
        %2149 = vmatprep.subr.mxu0 0.0
        %2150 = vmatpush2.msra.mxu0 0.0
        %2151 = vmatprep.subr.mxu0 0.0
        %2152 = vmatpush2.msra.mxu0 0.0
        %2153 = vmatprep.subr.mxu0 0.0
        %2154 = vmatpush2.msra.mxu0 0.0
        %2155 = vmatprep.subr.mxu0 0.0
        %2156 = vmatpush2.msra.mxu0 0.0
        %2157 = vmatprep.subr.mxu0 0.0
        %2158 = vmatpush2.msra.mxu0 0.0
        %2159 = vmatprep.subr.mxu0 0.0
        %2160 = vmatpush2.msra.mxu0 0.0
        %2161 = vmatprep.subr.mxu0 0.0
        %2162 = vmatpush2.msra.mxu0 0.0
        %2163 = vmatprep.subr.mxu0 0.0
        %2164 = vmatpush2.msra.mxu0 0.0
        %2165 = vmatprep.mubr.f32.mxu0 0.0
        %2166 = vmatmul.mubr.f32.gmra.mxu0 %v2002
        %v2167 = vpop.f32.mrf.mxu0
        %v2168 = vadd.f32 0.0, %v2167
        %v2169 = vpop.f32.mrf.mxu0
        %2170 = vmatprep.mubr.f32.mxu0 0.0
        %2171 = vmatmul.mubr.f32.gmra.mxu0 %v2005
        %v2172 = vpop.f32.mrf.mxu0
        %v2173 = vadd.f32 0.0, %v2172
        %v2174 = vpop.f32.mrf.mxu0
        %2175 = vmatprep.mubr.f32.mxu0 0.0
        %2176 = vmatmul.mubr.f32.gmra.mxu0 %v2008
        %v2177 = vpop.f32.mrf.mxu0
        %v2178 = vadd.f32 0.0, %v2177
        %v2179 = vpop.f32.mrf.mxu0
        %2180 = vmatprep.mubr.f32.mxu0 0.0
        %2181 = vmatmul.mubr.f32.gmra.mxu0 %v2011
        %v2182 = vpop.f32.mrf.mxu0
        %v2183 = vadd.f32 0.0, %v2182
        %v2184 = vpop.f32.mrf.mxu0
        %2185 = vmatprep.mubr.f32.mxu0 0.0
        %2186 = vmatmul.mubr.f32.gmra.mxu0 %v2014
        %v2187 = vpop.f32.mrf.mxu0
        %v2188 = vadd.f32 0.0, %v2187
        %v2189 = vpop.f32.mrf.mxu0
        %2190 = vmatprep.mubr.f32.mxu0 0.0
        %2191 = vmatmul.mubr.f32.gmra.mxu0 %v2017
        %v2192 = vpop.f32.mrf.mxu0
        %v2193 = vadd.f32 0.0, %v2192
        %v2194 = vpop.f32.mrf.mxu0
        %2195 = vmatprep.mubr.f32.mxu0 0.0
        %2196 = vmatmul.mubr.f32.gmra.mxu0 %v2020
        %v2197 = vpop.f32.mrf.mxu0
        %v2198 = vadd.f32 0.0, %v2197
        %v2199 = vpop.f32.mrf.mxu0
        %2200 = vmatprep.mubr.f32.mxu0 0.0
        %2201 = vmatmul.mubr.f32.gmra.mxu0 %v2023
        %v2202 = vpop.f32.mrf.mxu0
        %v2203 = vadd.f32 0.0, %v2202
        %v2204 = vpop.f32.mrf.mxu0
        %2205 = vmatprep.mubr.f32.mxu0 0.0
        %2206 = vmatmul.mubr.f32.gmra.mxu0 %v2026
        %v2207 = vpop.f32.mrf.mxu0
        %v2208 = vadd.f32 0.0, %v2207
        %v2209 = vpop.f32.mrf.mxu0
        %2210 = vmatprep.mubr.f32.mxu0 0.0
        %2211 = vmatmul.mubr.f32.gmra.mxu0 %v2029
        %v2212 = vpop.f32.mrf.mxu0
        %v2213 = vadd.f32 0.0, %v2212
        %v2214 = vpop.f32.mrf.mxu0
        %2215 = vmatprep.mubr.f32.mxu0 0.0
        %2216 = vmatmul.mubr.f32.gmra.mxu0 %v2032
        %v2217 = vpop.f32.mrf.mxu0
        %v2218 = vadd.f32 0.0, %v2217
        %v2219 = vpop.f32.mrf.mxu0
        %2220 = vmatprep.mubr.f32.mxu0 0.0
        %2221 = vmatmul.mubr.f32.gmra.mxu0 %v2035
        %v2222 = vpop.f32.mrf.mxu0
        %v2223 = vadd.f32 0.0, %v2222
        %v2224 = vpop.f32.mrf.mxu0
        %2225 = vmatprep.mubr.f32.mxu0 0.0
        %2226 = vmatmul.mubr.f32.gmra.mxu0 %v2038
        %v2227 = vpop.f32.mrf.mxu0
        %v2228 = vadd.f32 0.0, %v2227
        %v2229 = vpop.f32.mrf.mxu0
        %2230 = vmatprep.mubr.f32.mxu0 0.0
        %2231 = vmatmul.mubr.f32.gmra.mxu0 %v2041
        %v2232 = vpop.f32.mrf.mxu0
        %v2233 = vadd.f32 0.0, %v2232
        %v2234 = vpop.f32.mrf.mxu0
        %2235 = vmatprep.mubr.f32.mxu0 0.0
        %2236 = vmatmul.mubr.f32.gmra.mxu0 %v2044
        %v2237 = vpop.f32.mrf.mxu0
        %v2238 = vadd.f32 0.0, %v2237
        %v2239 = vpop.f32.mrf.mxu0
        %2240 = vmatprep.mubr.f32.mxu0 0.0
        %2241 = vmatmul.mubr.f32.gmra.mxu0 %v2047
        %v2242 = vpop.f32.mrf.mxu0
        %v2243 = vadd.f32 0.0, %v2242
        %v2244 = vpop.f32.mrf.mxu0
        %2245 = vmatprep.mubr.f32.mxu0 0.0
        %2246 = vmatmul.mubr.f32.gmra.mxu0 %v2050
        %v2247 = vpop.f32.mrf.mxu0
        %v2248 = vadd.f32 0.0, %v2247
        %v2249 = vpop.f32.mrf.mxu0
        %2250 = vmatprep.mubr.f32.mxu0 0.0
        %2251 = vmatmul.mubr.f32.gmra.mxu0 %v2053
        %v2252 = vpop.f32.mrf.mxu0
        %v2253 = vadd.f32 0.0, %v2252
        %v2254 = vpop.f32.mrf.mxu0
        %2255 = vmatprep.mubr.f32.mxu0 0.0
        %2256 = vmatmul.mubr.f32.gmra.mxu0 %v2056
        %v2257 = vpop.f32.mrf.mxu0
        %v2258 = vadd.f32 0.0, %v2257
        %v2259 = vpop.f32.mrf.mxu0
        %2260 = vmatprep.mubr.f32.mxu0 0.0
        %2261 = vmatmul.mubr.f32.gmra.mxu0 %v2059
        %v2262 = vpop.f32.mrf.mxu0
        %v2263 = vadd.f32 0.0, %v2262
        %v2264 = vpop.f32.mrf.mxu0
        %2265 = vmatprep.mubr.f32.mxu0 0.0
        %2266 = vmatmul.mubr.f32.gmra.mxu0 %v2062
        %v2267 = vpop.f32.mrf.mxu0
        %v2268 = vadd.f32 0.0, %v2267
        %v2269 = vpop.f32.mrf.mxu0
        %2270 = vmatprep.mubr.f32.mxu0 0.0
        %2271 = vmatmul.mubr.f32.gmra.mxu0 %v2065
        %v2272 = vpop.f32.mrf.mxu0
        %v2273 = vadd.f32 0.0, %v2272
        %v2274 = vpop.f32.mrf.mxu0
        %2275 = vmatprep.mubr.f32.mxu0 0.0
        %2276 = vmatmul.mubr.f32.gmra.mxu0 %v2068
        %v2277 = vpop.f32.mrf.mxu0
        %v2278 = vadd.f32 0.0, %v2277
        %v2279 = vpop.f32.mrf.mxu0
        %2280 = vmatprep.mubr.f32.mxu0 0.0
        %2281 = vmatmul.mubr.f32.gmra.mxu0 %v2071
        %v2282 = vpop.f32.mrf.mxu0
        %v2283 = vadd.f32 0.0, %v2282
        %v2284 = vpop.f32.mrf.mxu0
        %2285 = vmatprep.mubr.f32.mxu0 0.0
        %2286 = vmatmul.mubr.f32.gmra.mxu0 %v2074
        %v2287 = vpop.f32.mrf.mxu0
        %v2288 = vadd.f32 0.0, %v2287
        %v2289 = vpop.f32.mrf.mxu0
        %2290 = vmatprep.mubr.f32.mxu0 0.0
        %2291 = vmatmul.mubr.f32.gmra.mxu0 %v2077
        %v2292 = vpop.f32.mrf.mxu0
        %v2293 = vadd.f32 0.0, %v2292
        %v2294 = vpop.f32.mrf.mxu0
        %2295 = vmatprep.mubr.f32.mxu0 0.0
        %2296 = vmatmul.mubr.f32.gmra.mxu0 %v2080
        %v2297 = vpop.f32.mrf.mxu0
        %v2298 = vadd.f32 0.0, %v2297
        %v2299 = vpop.f32.mrf.mxu0
        %2300 = vmatprep.mubr.f32.mxu0 0.0
        %2301 = vmatmul.mubr.f32.gmra.mxu0 %v2083
        %v2302 = vpop.f32.mrf.mxu0
        %v2303 = vadd.f32 0.0, %v2302
        %v2304 = vpop.f32.mrf.mxu0
        %2305 = vmatprep.mubr.f32.mxu0 0.0
        %2306 = vmatmul.mubr.f32.gmra.mxu0 %v2086
        %v2307 = vpop.f32.mrf.mxu0
        %v2308 = vadd.f32 0.0, %v2307
        %v2309 = vpop.f32.mrf.mxu0
        %2310 = vmatprep.mubr.f32.mxu0 0.0
        %2311 = vmatmul.mubr.f32.gmra.mxu0 %v2089
        %v2312 = vpop.f32.mrf.mxu0
        %v2313 = vadd.f32 0.0, %v2312
        %v2314 = vpop.f32.mrf.mxu0
        %2315 = vmatprep.mubr.f32.mxu0 0.0
        %2316 = vmatmul.mubr.f32.gmra.mxu0 %v2092
        %v2317 = vpop.f32.mrf.mxu0
        %v2318 = vadd.f32 0.0, %v2317
        %v2319 = vpop.f32.mrf.mxu0
        %2320 = vmatprep.mubr.f32.mxu0 0.0
        %2321 = vmatmul.mubr.f32.gmra.mxu0 %v2095
        %v2322 = vpop.f32.mrf.mxu0
        %v2323 = vadd.f32 0.0, %v2322
        %v2324 = vpop.f32.mrf.mxu0
        %2325 = vdwg.mxu0
        %2326 = vst [vmem:[%s266] sm:$0xff] %v2168
        %2327 = vst [vmem:[%s266 + $0x8] sm:$0xff] %v2173
        %2328 = vst [vmem:[%s266 + $0x10] sm:$0xff] %v2178
        %2329 = vst [vmem:[%s266 + $0x18] sm:$0xff] %v2183
        %2330 = vst [vmem:[%s266 + $0x20] sm:$0xff] %v2188
        %2331 = vst [vmem:[%s266 + $0x28] sm:$0xff] %v2193
        %2332 = vst [vmem:[%s266 + $0x30] sm:$0xff] %v2198
        %2333 = vst [vmem:[%s266 + $0x38] sm:$0xff] %v2203
        %2334 = vst [vmem:[%s266 + $0x40] sm:$0xff] %v2208
        %2335 = vst [vmem:[%s266 + $0x48] sm:$0xff] %v2213
        %2336 = vst [vmem:[%s266 + $0x50] sm:$0xff] %v2218
        %2337 = vst [vmem:[%s266 + $0x58] sm:$0xff] %v2223
        %2338 = vst [vmem:[%s266 + $0x60] sm:$0xff] %v2228
        %2339 = vst [vmem:[%s266 + $0x68] sm:$0xff] %v2233
        %2340 = vst [vmem:[%s266 + $0x70] sm:$0xff] %v2238
        %2341 = vst [vmem:[%s266 + $0x78] sm:$0xff] %v2243
        %2342 = vst [vmem:[%s266 + $0x80] sm:$0xff] %v2248
        %2343 = vst [vmem:[%s266 + $0x88] sm:$0xff] %v2253
        %2344 = vst [vmem:[%s266 + $0x90] sm:$0xff] %v2258
        %2345 = vst [vmem:[%s266 + $0x98] sm:$0xff] %v2263
        %2346 = vst [vmem:[%s266 + $0xa0] sm:$0xff] %v2268
        %2347 = vst [vmem:[%s266 + $0xa8] sm:$0xff] %v2273
        %2348 = vst [vmem:[%s266 + $0xb0] sm:$0xff] %v2278
        %2349 = vst [vmem:[%s266 + $0xb8] sm:$0xff] %v2283
        %2350 = vst [vmem:[%s266 + $0xc0] sm:$0xff] %v2288
        %2351 = vst [vmem:[%s266 + $0xc8] sm:$0xff] %v2293
        %2352 = vst [vmem:[%s266 + $0xd0] sm:$0xff] %v2298
        %2353 = vst [vmem:[%s266 + $0xd8] sm:$0xff] %v2303
        %2354 = vst [vmem:[%s266 + $0xe0] sm:$0xff] %v2308
        %2355 = vst [vmem:[%s266 + $0xe8] sm:$0xff] %v2313
        %2356 = vst [vmem:[%s266 + $0xf0] sm:$0xff] %v2318
        %2357 = vst [vmem:[%s266 + $0xf8] sm:$0xff] %v2323
        %v2358 = vadd.f32 %v2168, %v2173
        %v2359 = vadd.f32 %v2358, %v2178
        %v2360 = vadd.f32 %v2359, %v2183
        %v2361 = vadd.f32 %v2360, %v2188
        %v2362 = vadd.f32 %v2361, %v2193
        %v2363 = vadd.f32 %v2362, %v2198
        %v2364 = vadd.f32 %v2363, %v2203
        %v2365 = vadd.f32 %v2364, %v2208
        %v2366 = vadd.f32 %v2365, %v2213
        %v2367 = vadd.f32 %v2366, %v2218
        %v2368 = vadd.f32 %v2367, %v2223
        %v2369 = vadd.f32 %v2368, %v2228
        %v2370 = vadd.f32 %v2369, %v2233
        %v2371 = vadd.f32 %v2370, %v2238
        %v2372 = vadd.f32 %v2371, %v2243
        %v2373 = vadd.f32 %v2372, %v2248
        %v2374 = vadd.f32 %v2373, %v2253
        %v2375 = vadd.f32 %v2374, %v2258
        %v2376 = vadd.f32 %v2375, %v2263
        %v2377 = vadd.f32 %v2376, %v2268
        %v2378 = vadd.f32 %v2377, %v2273
        %v2379 = vadd.f32 %v2378, %v2278
        %v2380 = vadd.f32 %v2379, %v2283
        %v2381 = vadd.f32 %v2380, %v2288
        %v2382 = vadd.f32 %v2381, %v2293
        %v2383 = vadd.f32 %v2382, %v2298
        %v2384 = vadd.f32 %v2383, %v2303
        %v2385 = vadd.f32 %v2384, %v2308
        %v2386 = vadd.f32 %v2385, %v2313
        %v2387 = vadd.f32 %v2386, %v2318
        %v2388 = vadd.f32 %v2387, %v2323
        %v2389 = vrot.slane %v2388, 4
        %v2390 = vadd.f32 %v2388, %v2389
        %v2391 = vrot.slane %v2390, 2
        %v2392 = vadd.f32 %v2390, %v2391
        %v2393 = vrot.slane %v2392, 1
        %v2394 = vadd.f32 %v2392, %v2393
        %2395 = vst [vmem:[%s272] sm:$0x1] %v2394
        %v2396 = vmul.f32 %v2168, %v2168
        %v2397 = vmul.f32 %v2173, %v2173
        %v2398 = vmul.f32 %v2178, %v2178
        %v2399 = vmul.f32 %v2183, %v2183
        %v2400 = vmul.f32 %v2188, %v2188
        %v2401 = vmul.f32 %v2193, %v2193
        %v2402 = vmul.f32 %v2198, %v2198
        %v2403 = vmul.f32 %v2203, %v2203
        %v2404 = vmul.f32 %v2208, %v2208
        %v2405 = vmul.f32 %v2213, %v2213
        %v2406 = vmul.f32 %v2218, %v2218
        %v2407 = vmul.f32 %v2223, %v2223
        %v2408 = vmul.f32 %v2228, %v2228
        %v2409 = vmul.f32 %v2233, %v2233
        %v2410 = vmul.f32 %v2238, %v2238
        %v2411 = vmul.f32 %v2243, %v2243
        %v2412 = vmul.f32 %v2248, %v2248
        %v2413 = vmul.f32 %v2253, %v2253
        %v2414 = vmul.f32 %v2258, %v2258
        %v2415 = vmul.f32 %v2263, %v2263
        %v2416 = vmul.f32 %v2268, %v2268
        %v2417 = vmul.f32 %v2273, %v2273
        %v2418 = vmul.f32 %v2278, %v2278
        %v2419 = vmul.f32 %v2283, %v2283
        %v2420 = vmul.f32 %v2288, %v2288
        %v2421 = vmul.f32 %v2293, %v2293
        %v2422 = vmul.f32 %v2298, %v2298
        %v2423 = vmul.f32 %v2303, %v2303
        %v2424 = vmul.f32 %v2308, %v2308
        %v2425 = vmul.f32 %v2313, %v2313
        %v2426 = vmul.f32 %v2318, %v2318
        %v2427 = vmul.f32 %v2323, %v2323
        %v2428 = vadd.f32 %v2396, %v2397
        %v2429 = vadd.f32 %v2428, %v2398
        %v2430 = vadd.f32 %v2429, %v2399
        %v2431 = vadd.f32 %v2430, %v2400
        %v2432 = vadd.f32 %v2431, %v2401
        %v2433 = vadd.f32 %v2432, %v2402
        %v2434 = vadd.f32 %v2433, %v2403
        %v2435 = vadd.f32 %v2434, %v2404
        %v2436 = vadd.f32 %v2435, %v2405
        %v2437 = vadd.f32 %v2436, %v2406
        %v2438 = vadd.f32 %v2437, %v2407
        %v2439 = vadd.f32 %v2438, %v2408
        %v2440 = vadd.f32 %v2439, %v2409
        %v2441 = vadd.f32 %v2440, %v2410
        %v2442 = vadd.f32 %v2441, %v2411
        %v2443 = vadd.f32 %v2442, %v2412
        %v2444 = vadd.f32 %v2443, %v2413
        %v2445 = vadd.f32 %v2444, %v2414
        %v2446 = vadd.f32 %v2445, %v2415
        %v2447 = vadd.f32 %v2446, %v2416
        %v2448 = vadd.f32 %v2447, %v2417
        %v2449 = vadd.f32 %v2448, %v2418
        %v2450 = vadd.f32 %v2449, %v2419
        %v2451 = vadd.f32 %v2450, %v2420
        %v2452 = vadd.f32 %v2451, %v2421
        %v2453 = vadd.f32 %v2452, %v2422
        %v2454 = vadd.f32 %v2453, %v2423
        %v2455 = vadd.f32 %v2454, %v2424
        %v2456 = vadd.f32 %v2455, %v2425
        %v2457 = vadd.f32 %v2456, %v2426
        %v2458 = vadd.f32 %v2457, %v2427
        %v2459 = vrot.slane %v2458, 4
        %v2460 = vadd.f32 %v2458, %v2459
        %v2461 = vrot.slane %v2460, 2
        %v2462 = vadd.f32 %v2460, %v2461
        %v2463 = vrot.slane %v2462, 1
        %v2464 = vadd.f32 %v2462, %v2463
        %2465 = vst [vmem:[%s278] sm:$0x1] %v2464
        %s2466 = sand.u32 %s135, 1
        %s2467 = scalar_lea.sflag [#allocation4], %s2466
        %s2468 = sand.u32 %s135, 1
        %s2469 = smul.addr %s2468, 256
        %s2470 = scalar_lea.vmem [#allocation3], %s2469
        %s2471 = sand.u32 %s24, 1
        %s2472 = scalar_lea.sflag [#allocation6], %s2471
        %s2473 = sand.u32 %s163, 1
        %s2474 = scalar_lea.vmem [#allocation5], %s2473
        %s2475 = sand.u32 %s24, 1
        %s2476 = scalar_lea.sflag [#allocation6], %s2475
        %s2477 = sand.u32 %s191, 1
        %s2478 = scalar_lea.vmem [#allocation7], %s2477
        // Predicated region
        $region41: #{tpu_custom_call.1} parent=35 // pred_check
          %p2479 = pneg %p145
        $region42: #{tpu_custom_call.1} parent=35 // pred_check_branch
          %2481 = sbr.rel (%p2479) target = $region44
        $region43: #{tpu_custom_call.1} parent=35 // pred_region
          %s2482 = smul.u32 32, %s29
          %s2484 = ssub.s32 4096, 4096
          %2485 = vsyncadd %s2467, %s2484
          %s2486 = smul.addr %s28, 32
          %s2487 = sadd.s32 %s2482, %s2486
          %s2488 = smul.addr %s2487, 128
          %s2489 = scalar_lea.hbm %s4, %s2488
          %s2490 = sshll.u32 %s2470, 4
          %s2491 = int_to_ptr.vmem [resolvable:$true] %s2490
          %2496 = dma.vmem_to_hbm [thread:$0]  %s2491, 4096, %s2489, %s2467, 128, 128, 8
        $region44: #{tpu_custom_call.1} parent=35 // pred_fallthru
          _
        // Predicated region
        $region45: #{tpu_custom_call.1} parent=35 // pred_check
          %p2497 = pneg %p173
        $region46: #{tpu_custom_call.1} parent=35 // pred_check_branch
          %2499 = sbr.rel (%p2497) target = $region48
        $region47: #{tpu_custom_call.1} parent=35 // pred_region
          %s2501 = ssub.s32 16, 16
          %2502 = vsyncadd %s2472, %s2501
          %s2503 = sadd.s32 %s29, %s28
          %s2504 = smul.addr %s2503, 16
          %s2505 = scalar_lea.hbm %s5, %s2504
          %s2507 = sshll.u32 %s2474, 4
          %s2508 = int_to_ptr.vmem [resolvable:$true] %s2507
          %2510 = dma.vmem_to_hbm [thread:$0]  %s2508, 16, %s2505, %s2472
        $region48: #{tpu_custom_call.1} parent=35 // pred_fallthru
          _
        // Predicated region
        $region49: #{tpu_custom_call.1} parent=35 // pred_check
          %p2511 = pneg %p201
        $region50: #{tpu_custom_call.1} parent=35 // pred_check_branch
          %2513 = sbr.rel (%p2511) target = $region52
        $region51: #{tpu_custom_call.1} parent=35 // pred_region
          %s2515 = ssub.s32 16, 16
          %2516 = vsyncadd %s2476, %s2515
          %s2517 = sadd.s32 %s29, %s28
          %s2518 = smul.addr %s2517, 16
          %s2519 = scalar_lea.hbm %s6, %s2518
          %s2521 = sshll.u32 %s2478, 4
          %s2522 = int_to_ptr.vmem [resolvable:$true] %s2521
          %2524 = dma.vmem_to_hbm [thread:$0]  %s2522, 16, %s2519, %s2476
        $region52: #{tpu_custom_call.1} parent=35 // pred_fallthru
          _
      $region36: #{tpu_custom_call.1} parent=5 // pred_fallthru
        _
      %p2525 = scmp.le.s32.totalorder 2, %s19
      // Predicated region
      $region53: #{tpu_custom_call.1} parent=5 // pred_check
        %p2526 = pneg %p2525
      $region54: #{tpu_custom_call.1} parent=5 // pred_check_branch
        %2528 = sbr.rel (%p2526) target = $region56
      $region55: #{tpu_custom_call.1} parent=5 // pred_region
        %s2529 = ssub.s32 %s19, 2
        // Predicated region
        $region57: #{tpu_custom_call.1} parent=55 // pred_check
          %p2530 = pneg %p151
        $region58: #{tpu_custom_call.1} parent=55 // pred_check_branch
          %2532 = sbr.rel (%p2530) target = $region60
        $region59: #{tpu_custom_call.1} parent=55 // pred_region
          %s2533 = sand.u32 %s136, 1
          %s2534 = scalar_lea.sflag [#allocation4], %s2533
          %s2535 = sand.u32 %s136, 1
          %s2536 = smul.addr %s2535, 256
          %s2537 = scalar_lea.vmem [#allocation3], %s2536
          %2538 = dma.done %s2534, 4096
        $region60: #{tpu_custom_call.1} parent=55 // pred_fallthru
          _
        // Predicated region
        $region61: #{tpu_custom_call.1} parent=55 // pred_check
          %p2539 = pneg %p179
        $region62: #{tpu_custom_call.1} parent=55 // pred_check_branch
          %2541 = sbr.rel (%p2539) target = $region64
        $region63: #{tpu_custom_call.1} parent=55 // pred_region
          %s2542 = sand.u32 %s25, 1
          %s2543 = scalar_lea.sflag [#allocation6], %s2542
          %s2544 = sand.u32 %s164, 1
          %s2545 = scalar_lea.vmem [#allocation5], %s2544
          %2546 = dma.done %s2543, 16
        $region64: #{tpu_custom_call.1} parent=55 // pred_fallthru
          _
        // Predicated region
        $region65: #{tpu_custom_call.1} parent=55 // pred_check
          %p2547 = pneg %p207
        $region66: #{tpu_custom_call.1} parent=55 // pred_check_branch
          %2549 = sbr.rel (%p2547) target = $region68
        $region67: #{tpu_custom_call.1} parent=55 // pred_region
          %s2550 = sand.u32 %s25, 1
          %s2551 = scalar_lea.sflag [#allocation6], %s2550
          %s2552 = sand.u32 %s192, 1
          %s2553 = scalar_lea.vmem [#allocation7], %s2552
          %2554 = dma.done %s2551, 16
        $region68: #{tpu_custom_call.1} parent=55 // pred_fallthru
          _
      $region56: #{tpu_custom_call.1} parent=5 // pred_fallthru
        _
    $region6: #{tpu_custom_call.1} parent=1 // loop_footer
      %s23 = sadd.s32 1, %s19
    $region7: #{tpu_custom_call.1} parent=1 // loop_footer_branch
      %18 = sbr.rel target = $region3
    $region8: #{tpu_custom_call.1} parent=1 // loop_exit
      _
    %2555 = vsyncpa [#allocation4], 1
    %s2556 = scalar_lea.sflag [#allocation4], 1
    %2557 = vsyncpa %s2556, 1
    %2558 = vsyncpa [#allocation6], 1
    %s2559 = scalar_lea.sflag [#allocation6], 1
    %2560 = vsyncpa %s2559, 1

</llo_original>
